<compile_context>
chip_gen: v7x
topology: tpu7x:2x2x1
jax: 0.10.0
libtpu: 0.0.40
codegen_flags: <defaults>
</compile_context>

<pallas_src>
import math

import jax
import jax.numpy as jnp
from jax.experimental import pallas as pl
from jax.experimental.pallas import tpu as pltpu

ACT_DTYPE = jnp.bfloat16   # dtype of the streamed embeddings / big matmul weights
OUT_PAD = 128              # final-linear output padded to a full lane width


def recsys_kernel(
    s_ref, l_ref, item_ref,          # activations: (T,E), (T,E), (T,E)  bf16
    wa1_ref, ba1_ref, wa2_ref,       # attention: (E,H) bf16, (1,H) f32, (1,H) f32
    wf1_ref, bf1_ref,                # head fc1:  (2E,H) bf16, (1,H) f32
    wf2_ref, bf2_ref,                # head fc2:  (H,OUT_PAD) f32, (1,OUT_PAD) f32
    out_ref,                         # (T, OUT_PAD) f32
):
    s = s_ref[...]
    l = l_ref[...]
    item = item_ref[...]
    T = s.shape[0]

    # --- AttentionLayer: run both embeddings through fc1 in ONE MXU pass ---
    x2 = jnp.concatenate([s, l], axis=0)                                  # (2T, E)
    h2 = jnp.dot(x2, wa1_ref[...], preferred_element_type=jnp.float32)
    h2 = jnp.maximum(h2 + ba1_ref[...], 0.0)                              # (2T, H)

    # second linear has out_features=1: broadcast-multiply by (1,H) + lane reduce.
    # (bias of this layer cancels in the 2-way softmax -> omitted)
    logits2 = jnp.sum(h2 * wa2_ref[...], axis=-1, keepdims=True)          # (2T, 1)
    logit_s = logits2[:T]
    logit_l = logits2[T:]

    # stable 2-way softmax over the stacked embeddings (dim=1 in torch code)
    m = jnp.maximum(logit_s, logit_l)
    e_s = jnp.exp(logit_s - m)
    e_l = jnp.exp(logit_l - m)
    inv_denom = pl.reciprocal(e_s + e_l, approx=True)                     # EUP vrcp
    w_s = e_s * inv_denom
    w_l = e_l * inv_denom

    # user_rep = sum_n attn_weights[:, n, None] * combined[:, n, :]
    user_rep = w_s * s.astype(jnp.float32) + w_l * l.astype(jnp.float32)  # (T, E) f32

    # --- Head: single Linear(2E,H) on concat([user_rep, item]) (K = 2E) ---
    x = jnp.concatenate([user_rep.astype(s.dtype), item], axis=1)         # (T, 2E) bf16
    h = jnp.dot(x, wf1_ref[...], preferred_element_type=jnp.float32)
    h = jnp.maximum(h + bf1_ref[...], 0.0)                                # (T, H)
    # TODO(synk): Dropout omitted (inference / eval semantics).

    # final Linear(H,2), N padded to OUT_PAD lanes (lane-dense stores)
    logits = jnp.dot(h, wf2_ref[...], preferred_element_type=jnp.float32)
    out_ref[...] = (logits + bf2_ref[...]).astype(out_ref.dtype)


def recsys_forward(user_s_emb, user_l_emb, item_emb, params, *, tile_b=512):
    B, E = user_s_emb.shape
    H = params["wa1"].shape[1]
    assert E % 128 == 0 and H % 128 == 0, "pad embed/hidden dims to a multiple of 128"
    assert tile_b % 8 == 0

    # batch tiling: pad B up to a multiple of tile_b with zero rows (sliced off below)
    nb = pl.cdiv(B, tile_b)
    B_pad = nb * tile_b

    def prep(x):
        x = x.astype(ACT_DTYPE)
        if B_pad != B:
            x = jnp.pad(x, ((0, B_pad - B), (0, 0)))
        return x

    s, l, item = prep(user_s_emb), prep(user_l_emb), prep(item_emb)

    row_spec = pl.BlockSpec((tile_b, E), lambda i: (i, 0))

    def full(shape):
        return pl.BlockSpec(shape, lambda i: (0, 0))   # weights stay resident

    out = pl.pallas_call(
        recsys_kernel,
        out_shape=jax.ShapeDtypeStruct((B_pad, OUT_PAD), jnp.float32),
        grid=(nb,),
        in_specs=[
            row_spec, row_spec, row_spec,
            full((E, H)), full((1, H)), full((1, H)),
            full((2 * E, H)), full((1, H)),
            full((H, OUT_PAD)), full((1, OUT_PAD)),
        ],
        out_specs=pl.BlockSpec((tile_b, OUT_PAD), lambda i: (i, 0)),
        compiler_params=pltpu.CompilerParams(
            dimension_semantics=("parallel",),          # megacore-shard the batch axis
            vmem_limit_bytes=32 * 1024 * 1024,          # safe on v5e/v6e/v7x for tile_b<=2048
        ),
    )(
        s, l, item,
        params["wa1"], params["ba1"], params["wa2"],
        params["wf1"], params["bf1"],
        params["wf2"], params["bf2"],
    )
    return out[:B, :2]


def xavier_uniform(key, shape, fan_in, fan_out, dtype=jnp.float32):
    bound = math.sqrt(6.0 / (fan_in + fan_out))
    return jax.random.uniform(key, shape, jnp.float32, -bound, bound).astype(dtype)


def init_params(key, embed_dim, hidden_dim):
    E, H = embed_dim, hidden_dim
    k1, k2, k3, k4 = jax.random.split(key, 4)
    # attention.fc: Linear(E,H) -> ReLU -> Dropout(id) -> Linear(H,1)
    wa1 = xavier_uniform(k1, (E, H), E, H, ACT_DTYPE)
    ba1 = jnp.zeros((1, H), jnp.float32)
    wa2 = xavier_uniform(k2, (1, H), H, 1, jnp.float32)   # stored pre-transposed
    # (ba2 omitted: it adds equally to both logits and cancels in the softmax)
    # model.fc: Linear(2E,H) -> ReLU -> Dropout(id) -> Linear(H,2)
    wf1 = xavier_uniform(k3, (2 * E, H), 2 * E, H, ACT_DTYPE)
    bf1 = jnp.zeros((1, H), jnp.float32)
    wf2 = jnp.zeros((H, OUT_PAD), jnp.float32).at[:, :2].set(
        xavier_uniform(k4, (H, 2), H, 2, jnp.float32))
    bf2 = jnp.zeros((1, OUT_PAD), jnp.float32)
    return dict(wa1=wa1, ba1=ba1, wa2=wa2, wf1=wf1, bf1=bf1, wf2=wf2, bf2=bf2)


def recsys_reference(user_s_emb, user_l_emb, item_emb, p):
    # pure-JAX reference of the PyTorch forward (eval mode), mirroring the kernel's
    # precision policy (bf16 streams / matmul weights, f32 accumulation).
    f32 = jnp.float32
    s = user_s_emb.astype(ACT_DTYPE)
    l = user_l_emb.astype(ACT_DTYPE)
    item = item_emb.astype(ACT_DTYPE)

    def attn_logit(x):
        h = jnp.maximum(jnp.dot(x, p["wa1"], preferred_element_type=f32) + p["ba1"], 0.0)
        return jnp.sum(h * p["wa2"], axis=-1, keepdims=True)

    logits = jnp.concatenate([attn_logit(s), attn_logit(l)], axis=1)      # (B, 2)
    w = jax.nn.softmax(logits, axis=1)
    user_rep = w[:, :1] * s.astype(f32) + w[:, 1:] * l.astype(f32)
    x = jnp.concatenate([user_rep.astype(ACT_DTYPE), item], axis=1)
    h = jnp.maximum(jnp.dot(x, p["wf1"], preferred_element_type=f32) + p["bf1"], 0.0)
    out = jnp.dot(h, p["wf2"], preferred_element_type=f32) + p["bf2"]
    return out[:, :2]


if __name__ == "__main__":
    # module defaults: embed_dim=384, hidden_dim=128; small batch that exercises
    # both the grid (2 tiles of 128 rows) and the tail-padding path.
    B, E, H = 250, 384, 128
    TILE_B = 128

    key = jax.random.PRNGKey(0)
    k_s, k_l, k_i, k_p = jax.random.split(key, 4)
    user_s_emb = jax.random.normal(k_s, (B, E), jnp.float32)
    user_l_emb = jax.random.normal(k_l, (B, E), jnp.float32)
    item_emb = jax.random.normal(k_i, (B, E), jnp.float32)
    params = init_params(k_p, E, H)

    out = recsys_forward(user_s_emb, user_l_emb, item_emb, params, tile_b=TILE_B)
    out = jax.block_until_ready(out)

    ref = recsys_reference(user_s_emb, user_l_emb, item_emb, params)
    assert out.shape == (B, 2)
    assert jnp.allclose(out, ref, atol=5e-3, rtol=5e-3), \
        f"max abs err = {jnp.max(jnp.abs(out - ref))}"
    print("KERNEL_OK")
</pallas_src>

<mosaic_0001>
module attributes {stable_mosaic.version = 11 : i64} {
  func.func @recsys_kernel(%arg0: i32, %arg1: memref<128x384xbf16, #tpu.memory_space<vmem>>, %arg2: memref<128x384xbf16, #tpu.memory_space<vmem>>, %arg3: memref<128x384xbf16, #tpu.memory_space<vmem>>, %arg4: memref<384x128xbf16, #tpu.memory_space<vmem>>, %arg5: memref<1x128xf32, #tpu.memory_space<vmem>>, %arg6: memref<1x128xf32, #tpu.memory_space<vmem>>, %arg7: memref<768x128xbf16, #tpu.memory_space<vmem>>, %arg8: memref<1x128xf32, #tpu.memory_space<vmem>>, %arg9: memref<128x128xf32, #tpu.memory_space<vmem>>, %arg10: memref<1x128xf32, #tpu.memory_space<vmem>>, %arg11: memref<128x128xf32, #tpu.memory_space<vmem>>) attributes {dimension_semantics = [#tpu.dimension_semantics<parallel>], iteration_bounds = array<i64: 2>, scalar_prefetch = 0 : i64, scratch_operands = 0 : i64, tpu.core_type = #tpu.core_type<tc>, window_params = [{transform_indices = @transform_0, window_bounds = array<i64: 128, 384>}, {transform_indices = @transform_1, window_bounds = array<i64: 128, 384>}, {transform_indices = @transform_2, window_bounds = array<i64: 128, 384>}, {pipeline_mode = #tpu.pipeline_mode<synchronous>, transform_indices = @transform_3, window_bounds = array<i64: 384, 128>}, {pipeline_mode = #tpu.pipeline_mode<synchronous>, transform_indices = @transform_4, window_bounds = array<i64: 1, 128>}, {pipeline_mode = #tpu.pipeline_mode<synchronous>, transform_indices = @transform_5, window_bounds = array<i64: 1, 128>}, {pipeline_mode = #tpu.pipeline_mode<synchronous>, transform_indices = @transform_6, window_bounds = array<i64: 768, 128>}, {pipeline_mode = #tpu.pipeline_mode<synchronous>, transform_indices = @transform_7, window_bounds = array<i64: 1, 128>}, {pipeline_mode = #tpu.pipeline_mode<synchronous>, transform_indices = @transform_8, window_bounds = array<i64: 128, 128>}, {pipeline_mode = #tpu.pipeline_mode<synchronous>, transform_indices = @transform_9, window_bounds = array<i64: 1, 128>}, {transform_indices = @transform_10, window_bounds = array<i64: 128, 128>}]} {
    %c0 = arith.constant 0 : index
    %c0_0 = arith.constant 0 : index
    %0 = vector.load %arg1[%c0, %c0_0] : memref<128x384xbf16, #tpu.memory_space<vmem>>, vector<128x384xbf16>
    %c0_1 = arith.constant 0 : index
    %c0_2 = arith.constant 0 : index
    %1 = vector.load %arg2[%c0_1, %c0_2] : memref<128x384xbf16, #tpu.memory_space<vmem>>, vector<128x384xbf16>
    %c0_3 = arith.constant 0 : index
    %c0_4 = arith.constant 0 : index
    %2 = vector.load %arg3[%c0_3, %c0_4] : memref<128x384xbf16, #tpu.memory_space<vmem>>, vector<128x384xbf16>
    %3 = tpu.concatenate %0, %1 in 0 : vector<128x384xbf16>, vector<128x384xbf16> -> vector<256x384xbf16>
    %c0_5 = arith.constant 0 : index
    %c0_6 = arith.constant 0 : index
    %4 = vector.load %arg4[%c0_5, %c0_6] : memref<384x128xbf16, #tpu.memory_space<vmem>>, vector<384x128xbf16>
    %cst = arith.constant dense<0.000000e+00> : vector<256x128xf32>
    %5 = tpu.matmul %3, %4, %cst {dimension_numbers = #tpu.dot_dimension_numbers<[1], [0], [0], [1], [0, 0, 1, 1], [], []>} : vector<256x384xbf16>, vector<384x128xbf16>, vector<256x128xf32> -> vector<256x128xf32>
    %c0_7 = arith.constant 0 : index
    %c0_8 = arith.constant 0 : index
    %6 = vector.load %arg5[%c0_7, %c0_8] : memref<1x128xf32, #tpu.memory_space<vmem>>, vector<1x128xf32>
    %7 = vector.broadcast %6 : vector<1x128xf32> to vector<256x128xf32>
    %8 = arith.addf %5, %7 : vector<256x128xf32>
    %cst_9 = arith.constant 0.000000e+00 : f32
    %9 = vector.broadcast %cst_9 : f32 to vector<256x128xf32>
    %10 = arith.maximumf %8, %9 : vector<256x128xf32>
    %c0_10 = arith.constant 0 : index
    %c0_11 = arith.constant 0 : index
    %11 = vector.load %arg6[%c0_10, %c0_11] : memref<1x128xf32, #tpu.memory_space<vmem>>, vector<1x128xf32>
    %12 = vector.broadcast %11 : vector<1x128xf32> to vector<256x128xf32>
    %13 = arith.mulf %10, %12 : vector<256x128xf32>
    %cst_12 = arith.constant dense<0.000000e+00> : vector<256xf32>
    %14 = vector.multi_reduction <add>, %13, %cst_12 [1] : vector<256x128xf32> to vector<256xf32>
    %15 = vector.shape_cast %14 : vector<256xf32> to vector<256x1xf32>
    %16 = vector.extract_strided_slice %15 {offsets = [0, 0], sizes = [128, 1], strides = [1, 1]} : vector<256x1xf32> to vector<128x1xf32>
    %17 = vector.extract_strided_slice %15 {offsets = [128, 0], sizes = [128, 1], strides = [1, 1]} : vector<256x1xf32> to vector<128x1xf32>
    %18 = arith.maximumf %16, %17 : vector<128x1xf32>
    %19 = arith.subf %16, %18 : vector<128x1xf32>
    %20 = math.exp %19 : vector<128x1xf32>
    %21 = arith.subf %17, %18 : vector<128x1xf32>
    %22 = math.exp %21 : vector<128x1xf32>
    %23 = arith.addf %20, %22 : vector<128x1xf32>
    %24 = tpu.reciprocal %23 {approx = true} : vector<128x1xf32> -> vector<128x1xf32>
    %25 = arith.mulf %20, %24 : vector<128x1xf32>
    %26 = arith.mulf %22, %24 : vector<128x1xf32>
    %27 = arith.extf %0 : vector<128x384xbf16> to vector<128x384xf32>
    %28 = vector.broadcast %25 : vector<128x1xf32> to vector<128x384xf32>
    %29 = arith.mulf %28, %27 : vector<128x384xf32>
    %30 = arith.extf %1 : vector<128x384xbf16> to vector<128x384xf32>
    %31 = vector.broadcast %26 : vector<128x1xf32> to vector<128x384xf32>
    %32 = arith.mulf %31, %30 : vector<128x384xf32>
    %33 = arith.addf %29, %32 : vector<128x384xf32>
    %34 = arith.truncf %33 : vector<128x384xf32> to vector<128x384xbf16>
    %35 = tpu.concatenate %34, %2 in 1 : vector<128x384xbf16>, vector<128x384xbf16> -> vector<128x768xbf16>
    %c0_13 = arith.constant 0 : index
    %c0_14 = arith.constant 0 : index
    %36 = vector.load %arg7[%c0_13, %c0_14] : memref<768x128xbf16, #tpu.memory_space<vmem>>, vector<768x128xbf16>
    %cst_15 = arith.constant dense<0.000000e+00> : vector<128x128xf32>
    %37 = tpu.matmul %35, %36, %cst_15 {dimension_numbers = #tpu.dot_dimension_numbers<[1], [0], [0], [1], [0, 0, 1, 1], [], []>} : vector<128x768xbf16>, vector<768x128xbf16>, vector<128x128xf32> -> vector<128x128xf32>
    %c0_16 = arith.constant 0 : index
    %c0_17 = arith.constant 0 : index
    %38 = vector.load %arg8[%c0_16, %c0_17] : memref<1x128xf32, #tpu.memory_space<vmem>>, vector<1x128xf32>
    %39 = vector.broadcast %38 : vector<1x128xf32> to vector<128x128xf32>
    %40 = arith.addf %37, %39 : vector<128x128xf32>
    %cst_18 = arith.constant 0.000000e+00 : f32
    %41 = vector.broadcast %cst_18 : f32 to vector<128x128xf32>
    %42 = arith.maximumf %40, %41 : vector<128x128xf32>
    %c0_19 = arith.constant 0 : index
    %c0_20 = arith.constant 0 : index
    %43 = vector.load %arg9[%c0_19, %c0_20] : memref<128x128xf32, #tpu.memory_space<vmem>>, vector<128x128xf32>
    %cst_21 = arith.constant dense<0.000000e+00> : vector<128x128xf32>
    %44 = tpu.matmul %42, %43, %cst_21 {dimension_numbers = #tpu.dot_dimension_numbers<[1], [0], [0], [1], [0, 0, 1, 1], [], []>} : vector<128x128xf32>, vector<128x128xf32>, vector<128x128xf32> -> vector<128x128xf32>
    %c0_22 = arith.constant 0 : index
    %c0_23 = arith.constant 0 : index
    %45 = vector.load %arg10[%c0_22, %c0_23] : memref<1x128xf32, #tpu.memory_space<vmem>>, vector<1x128xf32>
    %46 = vector.broadcast %45 : vector<1x128xf32> to vector<128x128xf32>
    %47 = arith.addf %44, %46 : vector<128x128xf32>
    %c0_24 = arith.constant 0 : index
    %c0_25 = arith.constant 0 : index
    %48 = vector.load %arg11[%c0_24, %c0_25] : memref<128x128xf32, #tpu.memory_space<vmem>>, vector<128x128xf32>
    tpu.vector_store %arg11[%c0_24, %c0_25], %47 {strides = array<i32>} : memref<128x128xf32, #tpu.memory_space<vmem>>, vector<128x128xf32>,
    return
  }
  func.func @transform_0(%arg0: i32) -> (i32, i32) {
    %c0_i32 = arith.constant 0 : i32
    %c0_i32_0 = arith.constant 0 : i32
    return %arg0, %c0_i32 : i32, i32
  }
  func.func @transform_1(%arg0: i32) -> (i32, i32) {
    %c0_i32 = arith.constant 0 : i32
    %c0_i32_0 = arith.constant 0 : i32
    return %arg0, %c0_i32 : i32, i32
  }
  func.func @transform_2(%arg0: i32) -> (i32, i32) {
    %c0_i32 = arith.constant 0 : i32
    %c0_i32_0 = arith.constant 0 : i32
    return %arg0, %c0_i32 : i32, i32
  }
  func.func @transform_3(%arg0: i32) -> (i32, i32) {
    %c0_i32 = arith.constant 0 : i32
    %c0_i32_0 = arith.constant 0 : i32
    %c0_i32_1 = arith.constant 0 : i32
    return %c0_i32, %c0_i32_0 : i32, i32
  }
  func.func @transform_4(%arg0: i32) -> (i32, i32) {
    %c0_i32 = arith.constant 0 : i32
    %c0_i32_0 = arith.constant 0 : i32
    %c0_i32_1 = arith.constant 0 : i32
    return %c0_i32, %c0_i32_0 : i32, i32
  }
  func.func @transform_5(%arg0: i32) -> (i32, i32) {
    %c0_i32 = arith.constant 0 : i32
    %c0_i32_0 = arith.constant 0 : i32
    %c0_i32_1 = arith.constant 0 : i32
    return %c0_i32, %c0_i32_0 : i32, i32
  }
  func.func @transform_6(%arg0: i32) -> (i32, i32) {
    %c0_i32 = arith.constant 0 : i32
    %c0_i32_0 = arith.constant 0 : i32
    %c0_i32_1 = arith.constant 0 : i32
    return %c0_i32, %c0_i32_0 : i32, i32
  }
  func.func @transform_7(%arg0: i32) -> (i32, i32) {
    %c0_i32 = arith.constant 0 : i32
    %c0_i32_0 = arith.constant 0 : i32
    %c0_i32_1 = arith.constant 0 : i32
    return %c0_i32, %c0_i32_0 : i32, i32
  }
  func.func @transform_8(%arg0: i32) -> (i32, i32) {
    %c0_i32 = arith.constant 0 : i32
    %c0_i32_0 = arith.constant 0 : i32
    %c0_i32_1 = arith.constant 0 : i32
    return %c0_i32, %c0_i32_0 : i32, i32
  }
  func.func @transform_9(%arg0: i32) -> (i32, i32) {
    %c0_i32 = arith.constant 0 : i32
    %c0_i32_0 = arith.constant 0 : i32
    %c0_i32_1 = arith.constant 0 : i32
    return %c0_i32, %c0_i32_0 : i32, i32
  }
  func.func @transform_10(%arg0: i32) -> (i32, i32) {
    %c0_i32 = arith.constant 0 : i32
    %c0_i32_0 = arith.constant 0 : i32
    return %arg0, %c0_i32 : i32, i32
  }
}

</mosaic_0001>

<llo_original>
// kernel: tpu_custom_call.1
$region0: #{tpu_custom_call.1}
  #allocation0 [shape = 'u32[]', space=smem, size = 0x4, offset = 0x4, fixed_abs, tag = 'smem constant byte address 0x4 - core index']
  #allocation1 [shape = 'u32[144,128]{1,0:T(1,128)}', space=vmem, size = 0x12000, scoped, tag = 'internal scratch']
  %s0 = inlined_call_operand.hbm [shape: bf16[256,384], index: 0, kind: input, shape index: {}]
  %s1 = inlined_call_operand.hbm [shape: bf16[256,384], index: 1, kind: input, shape index: {}]
  %s2 = inlined_call_operand.hbm [shape: bf16[256,384], index: 2, kind: input, shape index: {}]
  %s3 = inlined_call_operand.hbm [shape: bf16[384,128], index: 3, kind: input, shape index: {}]
  %s4 = inlined_call_operand.vmem [shape: f32[1,128], index: 4, kind: input, shape index: {}]
  %s5 = inlined_call_operand.vmem [shape: f32[1,128], index: 5, kind: input, shape index: {}]
  %s6 = inlined_call_operand.hbm [shape: bf16[768,128], index: 6, kind: input, shape index: {}]
  %s7 = inlined_call_operand.vmem [shape: f32[1,128], index: 7, kind: input, shape index: {}]
  %s8 = inlined_call_operand.hbm [shape: f32[128,128], index: 8, kind: input, shape index: {}]
  %s9 = inlined_call_operand.vmem [shape: f32[1,128], index: 9, kind: input, shape index: {}]
  %s10 = inlined_call_operand.hbm [shape: f32[256,128], index: 10, kind: output, shape index: {}]
  %s11 = sld [smem:[#allocation0]]
  $region97: #{tpu_custom_call.1} parent=0
    _
  %s13 = ssub.s32 1, %s11
  %s14 = scalar_select 0, %s13, %s11
  $region1: #{tpu_custom_call.1} parent=0
    #allocation2 [shape = 'u8[196608]{0}', space=vmem, size = 0x30000, scoped, tag = 'input window, operand 0']
    #allocation3 [shape = 's32[2]{0}', space=sflag, size = 0x8, scoped, tag = 'scoped memory for tpu_custom_call.1']
    #allocation4 [shape = 's32[2]{0}', space=sflag, size = 0x8, scoped, tag = 'scoped memory for tpu_custom_call.1']
    #allocation5 [shape = 'u8[196608]{0}', space=vmem, size = 0x30000, scoped, tag = 'input window, operand 1']
    #allocation6 [shape = 's32[2]{0}', space=sflag, size = 0x8, scoped, tag = 'scoped memory for tpu_custom_call.1']
    #allocation7 [shape = 'u8[196608]{0}', space=vmem, size = 0x30000, scoped, tag = 'input window, operand 2']
    #allocation8 [shape = 'u8[98304]{0}', space=vmem, size = 0x18000, scoped, tag = 'input window, operand 3, single buffered']
    #allocation9 [shape = 's32[1]{0}', space=sflag, size = 0x4, scoped, tag = 'scoped memory for tpu_custom_call.1']
    #allocation10 [shape = 'u8[196608]{0}', space=vmem, size = 0x30000, scoped, tag = 'input window, operand 6, single buffered']
    #allocation11 [shape = 'u8[65536]{0}', space=vmem, size = 0x10000, scoped, tag = 'input window, operand 8, single buffered']
    #allocation12 [shape = 's32[1]{0}', space=sflag, size = 0x4, scoped, tag = 'scoped memory for tpu_custom_call.1']
    #allocation13 [shape = 'u8[131072]{0}', space=vmem, size = 0x20000, scoped, tag = 'output window, operand 0']
    %15 = vsyncpa [#allocation3], 0
    %s16 = scalar_lea.sflag [#allocation3], 1
    %17 = vsyncpa %s16, 0
    %18 = vsyncpa [#allocation6], 0
    %s19 = scalar_lea.sflag [#allocation6], 1
    %20 = vsyncpa %s19, 0
    %21 = vsyncpa [#allocation9], 0
    %22 = vsyncpa [#allocation12], 0
    %23 = vsyncpa [#allocation4], 0
    %s24 = scalar_lea.sflag [#allocation4], 1
    %25 = vsyncpa %s24, 0
    loop: start=0, step=1, limit=4
    $region2: #{tpu_custom_call.1} parent=1 // loop_pre_header
      _
    $region3: #{tpu_custom_call.1} parent=1 // loop_header
      %s27 = sphi 0, %s31
      %p28 = scmp.ge.s32.totalorder %s27, 4
      %s37 = sphi 0, %s39
      %s40 = sphi 0, %s37
      %s41 = sphi 0, %s40
      %s57 = sphi 0, %s41
      %s63 = sphi 0, %s65
      %s66 = sphi 0, %s63
      %s67 = sphi 0, %s66
      %s83 = sphi 0, %s67
      %s89 = sphi 0, %s91
      %s92 = sphi 0, %s89
      %s93 = sphi 0, %s92
      %s109 = sphi 0, %s93
      %s113 = sphi 0, %s113
      %s115 = sphi 0, %s113
      %s116 = sphi 0, %s115
      %s130 = sphi 0, %s116
      %s134 = sphi 0, %s134
      %s136 = sphi 0, %s134
      %s137 = sphi 0, %s136
      %s151 = sphi 0, %s137
      %s155 = sphi 0, %s155
      %s157 = sphi 0, %s155
      %s158 = sphi 0, %s157
      %s172 = sphi 0, %s158
      %s176 = sphi 0, %s176
      %s178 = sphi 0, %s176
      %s179 = sphi 0, %s178
      %s193 = sphi 0, %s179
      %s197 = sphi 0, %s197
      %s199 = sphi 0, %s197
      %s200 = sphi 0, %s199
      %s214 = sphi 0, %s200
      %s218 = sphi 0, %s218
      %s220 = sphi 0, %s218
      %s221 = sphi 0, %s220
      %s235 = sphi 0, %s221
      %s239 = sphi 0, %s239
      %s241 = sphi 0, %s239
      %s242 = sphi 0, %s241
      %s256 = sphi 0, %s242
      %s262 = sphi 0, %s264
      %s265 = sphi 0, %s262
      %s266 = sphi 0, %s265
      %s282 = sphi 0, %s266
    $region4: #{tpu_custom_call.1} parent=1 // loop_header_branch
      %30 = sbr.rel (%p28) target = $region8
    $region5: #{tpu_custom_call.1} parent=1 // loop_body
      %s32 = ssub.s32 %s27, 1
      %s33 = ssub.s32 %s27, 2
      %s34 = sadd.s32 %s27, 1
      %s35 = ssub.s32 %s27, %s34
      %p36 = scmp.eq.s32.totalorder %s35, 0
      %s38 = sadd.s32 %s37, 1
      %s39 = scalar_select %p36, %s37, %s38
      %p42 = pneg %p36
      %p43 = scmp.eq.s32.totalorder %s27, 1
      %p44 = por %p42, %p43
      %p45 = scmp.ne.s32.totalorder %s37, %s40
      %p46 = scmp.eq.s32.totalorder %s27, 0
      %p47 = por %p45, %p46
      %p48 = scmp.ne.s32.totalorder %s37, %s40
      %p49 = scmp.eq.s32.totalorder %s32, 1
      %p50 = por %p48, %p49
      %p51 = scmp.ne.s32.totalorder %s40, %s41
      %p52 = scmp.eq.s32.totalorder %s32, 0
      %p53 = por %p51, %p52
      %p54 = scmp.ne.s32.totalorder %s40, %s41
      %p55 = scmp.eq.s32.totalorder %s33, 1
      %p56 = por %p54, %p55
      %p58 = scmp.ne.s32.totalorder %s41, %s57
      %p59 = scmp.eq.s32.totalorder %s33, 0
      %p60 = por %p58, %p59
      %s61 = ssub.s32 %s27, %s34
      %p62 = scmp.eq.s32.totalorder %s61, 0
      %s64 = sadd.s32 %s63, 1
      %s65 = scalar_select %p62, %s63, %s64
      %p68 = pneg %p62
      %p69 = scmp.eq.s32.totalorder %s27, 1
      %p70 = por %p68, %p69
      %p71 = scmp.ne.s32.totalorder %s63, %s66
      %p72 = scmp.eq.s32.totalorder %s27, 0
      %p73 = por %p71, %p72
      %p74 = scmp.ne.s32.totalorder %s63, %s66
      %p75 = scmp.eq.s32.totalorder %s32, 1
      %p76 = por %p74, %p75
      %p77 = scmp.ne.s32.totalorder %s66, %s67
      %p78 = scmp.eq.s32.totalorder %s32, 0
      %p79 = por %p77, %p78
      %p80 = scmp.ne.s32.totalorder %s66, %s67
      %p81 = scmp.eq.s32.totalorder %s33, 1
      %p82 = por %p80, %p81
      %p84 = scmp.ne.s32.totalorder %s67, %s83
      %p85 = scmp.eq.s32.totalorder %s33, 0
      %p86 = por %p84, %p85
      %s87 = ssub.s32 %s27, %s34
      %p88 = scmp.eq.s32.totalorder %s87, 0
      %s90 = sadd.s32 %s89, 1
      %s91 = scalar_select %p88, %s89, %s90
      %p94 = pneg %p88
      %p95 = scmp.eq.s32.totalorder %s27, 1
      %p96 = por %p94, %p95
      %p97 = scmp.ne.s32.totalorder %s89, %s92
      %p98 = scmp.eq.s32.totalorder %s27, 0
      %p99 = por %p97, %p98
      %p100 = scmp.ne.s32.totalorder %s89, %s92
      %p101 = scmp.eq.s32.totalorder %s32, 1
      %p102 = por %p100, %p101
      %p103 = scmp.ne.s32.totalorder %s92, %s93
      %p104 = scmp.eq.s32.totalorder %s32, 0
      %p105 = por %p103, %p104
      %p106 = scmp.ne.s32.totalorder %s92, %s93
      %p107 = scmp.eq.s32.totalorder %s33, 1
      %p108 = por %p106, %p107
      %p110 = scmp.ne.s32.totalorder %s93, %s109
      %p111 = scmp.eq.s32.totalorder %s33, 0
      %p112 = por %p110, %p111
      %s114 = sadd.s32 %s113, 1
      %p117 = scmp.eq.s32.totalorder %s27, 1
      %p118 = scmp.ne.s32.totalorder %s113, %s115
      %p119 = scmp.eq.s32.totalorder %s27, 0
      %p120 = por %p118, %p119
      %p121 = scmp.ne.s32.totalorder %s113, %s115
      %p122 = scmp.eq.s32.totalorder %s32, 1
      %p123 = por %p121, %p122
      %p124 = scmp.ne.s32.totalorder %s115, %s116
      %p125 = scmp.eq.s32.totalorder %s32, 0
      %p126 = por %p124, %p125
      %p127 = scmp.ne.s32.totalorder %s115, %s116
      %p128 = scmp.eq.s32.totalorder %s33, 1
      %p129 = por %p127, %p128
      %p131 = scmp.ne.s32.totalorder %s116, %s130
      %p132 = scmp.eq.s32.totalorder %s33, 0
      %p133 = por %p131, %p132
      %s135 = sadd.s32 %s134, 1
      %p138 = scmp.eq.s32.totalorder %s27, 1
      %p139 = scmp.ne.s32.totalorder %s134, %s136
      %p140 = scmp.eq.s32.totalorder %s27, 0
      %p141 = por %p139, %p140
      %p142 = scmp.ne.s32.totalorder %s134, %s136
      %p143 = scmp.eq.s32.totalorder %s32, 1
      %p144 = por %p142, %p143
      %p145 = scmp.ne.s32.totalorder %s136, %s137
      %p146 = scmp.eq.s32.totalorder %s32, 0
      %p147 = por %p145, %p146
      %p148 = scmp.ne.s32.totalorder %s136, %s137
      %p149 = scmp.eq.s32.totalorder %s33, 1
      %p150 = por %p148, %p149
      %p152 = scmp.ne.s32.totalorder %s137, %s151
      %p153 = scmp.eq.s32.totalorder %s33, 0
      %p154 = por %p152, %p153
      %s156 = sadd.s32 %s155, 1
      %p159 = scmp.eq.s32.totalorder %s27, 1
      %p160 = scmp.ne.s32.totalorder %s155, %s157
      %p161 = scmp.eq.s32.totalorder %s27, 0
      %p162 = por %p160, %p161
      %p163 = scmp.ne.s32.totalorder %s155, %s157
      %p164 = scmp.eq.s32.totalorder %s32, 1
      %p165 = por %p163, %p164
      %p166 = scmp.ne.s32.totalorder %s157, %s158
      %p167 = scmp.eq.s32.totalorder %s32, 0
      %p168 = por %p166, %p167
      %p169 = scmp.ne.s32.totalorder %s157, %s158
      %p170 = scmp.eq.s32.totalorder %s33, 1
      %p171 = por %p169, %p170
      %p173 = scmp.ne.s32.totalorder %s158, %s172
      %p174 = scmp.eq.s32.totalorder %s33, 0
      %p175 = por %p173, %p174
      %s177 = sadd.s32 %s176, 1
      %p180 = scmp.eq.s32.totalorder %s27, 1
      %p181 = scmp.ne.s32.totalorder %s176, %s178
      %p182 = scmp.eq.s32.totalorder %s27, 0
      %p183 = por %p181, %p182
      %p184 = scmp.ne.s32.totalorder %s176, %s178
      %p185 = scmp.eq.s32.totalorder %s32, 1
      %p186 = por %p184, %p185
      %p187 = scmp.ne.s32.totalorder %s178, %s179
      %p188 = scmp.eq.s32.totalorder %s32, 0
      %p189 = por %p187, %p188
      %p190 = scmp.ne.s32.totalorder %s178, %s179
      %p191 = scmp.eq.s32.totalorder %s33, 1
      %p192 = por %p190, %p191
      %p194 = scmp.ne.s32.totalorder %s179, %s193
      %p195 = scmp.eq.s32.totalorder %s33, 0
      %p196 = por %p194, %p195
      %s198 = sadd.s32 %s197, 1
      %p201 = scmp.eq.s32.totalorder %s27, 1
      %p202 = scmp.ne.s32.totalorder %s197, %s199
      %p203 = scmp.eq.s32.totalorder %s27, 0
      %p204 = por %p202, %p203
      %p205 = scmp.ne.s32.totalorder %s197, %s199
      %p206 = scmp.eq.s32.totalorder %s32, 1
      %p207 = por %p205, %p206
      %p208 = scmp.ne.s32.totalorder %s199, %s200
      %p209 = scmp.eq.s32.totalorder %s32, 0
      %p210 = por %p208, %p209
      %p211 = scmp.ne.s32.totalorder %s199, %s200
      %p212 = scmp.eq.s32.totalorder %s33, 1
      %p213 = por %p211, %p212
      %p215 = scmp.ne.s32.totalorder %s200, %s214
      %p216 = scmp.eq.s32.totalorder %s33, 0
      %p217 = por %p215, %p216
      %s219 = sadd.s32 %s218, 1
      %p222 = scmp.eq.s32.totalorder %s27, 1
      %p223 = scmp.ne.s32.totalorder %s218, %s220
      %p224 = scmp.eq.s32.totalorder %s27, 0
      %p225 = por %p223, %p224
      %p226 = scmp.ne.s32.totalorder %s218, %s220
      %p227 = scmp.eq.s32.totalorder %s32, 1
      %p228 = por %p226, %p227
      %p229 = scmp.ne.s32.totalorder %s220, %s221
      %p230 = scmp.eq.s32.totalorder %s32, 0
      %p231 = por %p229, %p230
      %p232 = scmp.ne.s32.totalorder %s220, %s221
      %p233 = scmp.eq.s32.totalorder %s33, 1
      %p234 = por %p232, %p233
      %p236 = scmp.ne.s32.totalorder %s221, %s235
      %p237 = scmp.eq.s32.totalorder %s33, 0
      %p238 = por %p236, %p237
      %s240 = sadd.s32 %s239, 1
      %p243 = scmp.eq.s32.totalorder %s27, 1
      %p244 = scmp.ne.s32.totalorder %s239, %s241
      %p245 = scmp.eq.s32.totalorder %s27, 0
      %p246 = por %p244, %p245
      %p247 = scmp.ne.s32.totalorder %s239, %s241
      %p248 = scmp.eq.s32.totalorder %s32, 1
      %p249 = por %p247, %p248
      %p250 = scmp.ne.s32.totalorder %s241, %s242
      %p251 = scmp.eq.s32.totalorder %s32, 0
      %p252 = por %p250, %p251
      %p253 = scmp.ne.s32.totalorder %s241, %s242
      %p254 = scmp.eq.s32.totalorder %s33, 1
      %p255 = por %p253, %p254
      %p257 = scmp.ne.s32.totalorder %s242, %s256
      %p258 = scmp.eq.s32.totalorder %s33, 0
      %p259 = por %p257, %p258
      %s260 = ssub.s32 %s27, %s34
      %p261 = scmp.eq.s32.totalorder %s260, 0
      %s263 = sadd.s32 %s262, 1
      %s264 = scalar_select %p261, %s262, %s263
      %p267 = pneg %p261
      %p268 = scmp.eq.s32.totalorder %s27, 1
      %p269 = por %p267, %p268
      %p270 = scmp.ne.s32.totalorder %s262, %s265
      %p271 = scmp.eq.s32.totalorder %s27, 0
      %p272 = por %p270, %p271
      %p273 = scmp.ne.s32.totalorder %s262, %s265
      %p274 = scmp.eq.s32.totalorder %s32, 1
      %p275 = por %p273, %p274
      %p276 = scmp.ne.s32.totalorder %s265, %s266
      %p277 = scmp.eq.s32.totalorder %s32, 0
      %p278 = por %p276, %p277
      %p279 = scmp.ne.s32.totalorder %s265, %s266
      %p280 = scmp.eq.s32.totalorder %s33, 1
      %p281 = por %p279, %p280
      %p283 = scmp.ne.s32.totalorder %s266, %s282
      %p284 = scmp.eq.s32.totalorder %s33, 0
      %p285 = por %p283, %p284
      %p286 = scmp.le.s32.totalorder 1, %s27
      %p287 = scmp.lt.s32.totalorder %s27, 3
      %p288 = pnand %p286, %p287
      %p289 = pneg %p288
      // Predicated region
      $region9: #{tpu_custom_call.1} parent=5 // pred_check
        _
      $region10: #{tpu_custom_call.1} parent=5 // pred_check_branch
        %291 = sbr.rel (%p288) target = $region12
      $region11: #{tpu_custom_call.1} parent=5 // pred_region
        %s292 = ssub.s32 %s27, 1
        // Predicated region
        $region13: #{tpu_custom_call.1} parent=11 // pred_check
          %p293 = pneg %p126
        $region14: #{tpu_custom_call.1} parent=11 // pred_check_branch
          %295 = sbr.rel (%p293) target = $region16
        $region15: #{tpu_custom_call.1} parent=11 // pred_region
          %s297 = ssub.s32 3072, 3072
          %298 = vsyncadd [#allocation9], %s297
          %s299 = sshll.u32 [#allocation8], 4
          %s300 = int_to_ptr.vmem [resolvable:$true] %s299
          %305 = dma.hbm_to_vmem [thread:$0]  %s3, 3072, %s300, [#allocation9], 64, 64, 4
        $region16: #{tpu_custom_call.1} parent=11 // pred_fallthru
          _
        // Predicated region
        $region17: #{tpu_custom_call.1} parent=11 // pred_check
          %p306 = pneg %p147
        $region18: #{tpu_custom_call.1} parent=11 // pred_check_branch
          %308 = sbr.rel (%p306) target = $region20
        $region19: #{tpu_custom_call.1} parent=11 // pred_region
          _
        $region20: #{tpu_custom_call.1} parent=11 // pred_fallthru
          _
        // Predicated region
        $region21: #{tpu_custom_call.1} parent=11 // pred_check
          %p309 = pneg %p168
        $region22: #{tpu_custom_call.1} parent=11 // pred_check_branch
          %311 = sbr.rel (%p309) target = $region24
        $region23: #{tpu_custom_call.1} parent=11 // pred_region
          _
        $region24: #{tpu_custom_call.1} parent=11 // pred_fallthru
          _
        // Predicated region
        $region25: #{tpu_custom_call.1} parent=11 // pred_check
          %p312 = pneg %p189
        $region26: #{tpu_custom_call.1} parent=11 // pred_check_branch
          %314 = sbr.rel (%p312) target = $region28
        $region27: #{tpu_custom_call.1} parent=11 // pred_region
          %s316 = ssub.s32 6144, 6144
          %317 = vsyncadd [#allocation9], %s316
          %s318 = sshll.u32 [#allocation10], 4
          %s319 = int_to_ptr.vmem [resolvable:$true] %s318
          %324 = dma.hbm_to_vmem [thread:$0]  %s6, 6144, %s319, [#allocation9], 64, 64, 4
        $region28: #{tpu_custom_call.1} parent=11 // pred_fallthru
          _
        // Predicated region
        $region29: #{tpu_custom_call.1} parent=11 // pred_check
          %p325 = pneg %p210
        $region30: #{tpu_custom_call.1} parent=11 // pred_check_branch
          %327 = sbr.rel (%p325) target = $region32
        $region31: #{tpu_custom_call.1} parent=11 // pred_region
          _
        $region32: #{tpu_custom_call.1} parent=11 // pred_fallthru
          _
        // Predicated region
        $region33: #{tpu_custom_call.1} parent=11 // pred_check
          %p328 = pneg %p231
        $region34: #{tpu_custom_call.1} parent=11 // pred_check_branch
          %330 = sbr.rel (%p328) target = $region36
        $region35: #{tpu_custom_call.1} parent=11 // pred_region
          %s332 = ssub.s32 2048, 2048
          %333 = vsyncadd [#allocation12], %s332
          %s334 = sshll.u32 [#allocation11], 4
          %s335 = int_to_ptr.vmem [resolvable:$true] %s334
          %340 = dma.hbm_to_vmem [thread:$0]  %s8, 2048, %s335, [#allocation12], 128, 128, 8
        $region36: #{tpu_custom_call.1} parent=11 // pred_fallthru
          _
        // Predicated region
        $region37: #{tpu_custom_call.1} parent=11 // pred_check
          %p341 = pneg %p252
        $region38: #{tpu_custom_call.1} parent=11 // pred_check_branch
          %343 = sbr.rel (%p341) target = $region40
        $region39: #{tpu_custom_call.1} parent=11 // pred_region
          _
        $region40: #{tpu_custom_call.1} parent=11 // pred_fallthru
          _
      $region12: #{tpu_custom_call.1} parent=5 // pred_fallthru
        _
      %p344 = scmp.lt.s32.totalorder %s27, 2
      // Predicated region
      $region41: #{tpu_custom_call.1} parent=5 // pred_check
        %p345 = pneg %p344
      $region42: #{tpu_custom_call.1} parent=5 // pred_check_branch
        %347 = sbr.rel (%p345) target = $region44
      $region43: #{tpu_custom_call.1} parent=5 // pred_region
        // Predicated region
        $region45: #{tpu_custom_call.1} parent=43 // pred_check
          %p348 = pneg %p47
        $region46: #{tpu_custom_call.1} parent=43 // pred_check_branch
          %350 = sbr.rel (%p348) target = $region48
        $region47: #{tpu_custom_call.1} parent=43 // pred_region
          %s351 = sand.u32 %s37, 1
          %s352 = scalar_lea.sflag [#allocation3], %s351
          %s353 = sand.u32 %s37, 1
          %s354 = smul.addr %s353, 192
          %s355 = scalar_lea.vmem [#allocation2], %s354
          %s356 = smul.u32 16, %s27
          %s358 = ssub.s32 3072, 3072
          %359 = vsyncadd %s352, %s358
          %s360 = smul.addr %s356, 3
          %s361 = smul.addr %s360, 64
          %s362 = scalar_lea.hbm %s0, %s361
          %s363 = sshll.u32 %s355, 4
          %s364 = int_to_ptr.vmem [resolvable:$true] %s363
          %369 = dma.hbm_to_vmem [thread:$0]  %s362, 3072, %s364, %s352, 192, 192, 12
        $region48: #{tpu_custom_call.1} parent=43 // pred_fallthru
          _
        // Predicated region
        $region49: #{tpu_custom_call.1} parent=43 // pred_check
          %p370 = pneg %p73
        $region50: #{tpu_custom_call.1} parent=43 // pred_check_branch
          %372 = sbr.rel (%p370) target = $region52
        $region51: #{tpu_custom_call.1} parent=43 // pred_region
          %s373 = sand.u32 %s27, 1
          %s374 = scalar_lea.sflag [#allocation6], %s373
          %s375 = sand.u32 %s63, 1
          %s376 = smul.addr %s375, 192
          %s377 = scalar_lea.vmem [#allocation5], %s376
          %s378 = smul.u32 16, %s27
          %s380 = ssub.s32 3072, 3072
          %381 = vsyncadd %s374, %s380
          %s382 = smul.addr %s378, 3
          %s383 = smul.addr %s382, 64
          %s384 = scalar_lea.hbm %s1, %s383
          %s385 = sshll.u32 %s377, 4
          %s386 = int_to_ptr.vmem [resolvable:$true] %s385
          %391 = dma.hbm_to_vmem [thread:$0]  %s384, 3072, %s386, %s374, 192, 192, 12
        $region52: #{tpu_custom_call.1} parent=43 // pred_fallthru
          _
        // Predicated region
        $region53: #{tpu_custom_call.1} parent=43 // pred_check
          %p392 = pneg %p99
        $region54: #{tpu_custom_call.1} parent=43 // pred_check_branch
          %394 = sbr.rel (%p392) target = $region56
        $region55: #{tpu_custom_call.1} parent=43 // pred_region
          %s395 = sand.u32 %s27, 1
          %s396 = scalar_lea.sflag [#allocation6], %s395
          %s397 = sand.u32 %s89, 1
          %s398 = smul.addr %s397, 192
          %s399 = scalar_lea.vmem [#allocation7], %s398
          %s400 = smul.u32 16, %s27
          %s402 = ssub.s32 3072, 3072
          %403 = vsyncadd %s396, %s402
          %s404 = smul.addr %s400, 3
          %s405 = smul.addr %s404, 64
          %s406 = scalar_lea.hbm %s2, %s405
          %s407 = sshll.u32 %s399, 4
          %s408 = int_to_ptr.vmem [resolvable:$true] %s407
          %413 = dma.hbm_to_vmem [thread:$0]  %s406, 3072, %s408, %s396, 192, 192, 12
        $region56: #{tpu_custom_call.1} parent=43 // pred_fallthru
          _
      $region44: #{tpu_custom_call.1} parent=5 // pred_fallthru
        _
      %p414 = scmp.le.s32.totalorder 1, %s27
      %p415 = scmp.lt.s32.totalorder %s27, 3
      %p416 = pnand %p414, %p415
      %p417 = pneg %p416
      // Predicated region
      $region57: #{tpu_custom_call.1} parent=5 // pred_check
        _
      $region58: #{tpu_custom_call.1} parent=5 // pred_check_branch
        %419 = sbr.rel (%p416) target = $region60
      $region59: #{tpu_custom_call.1} parent=5 // pred_region
        %s420 = ssub.s32 %s27, 1
        %s421 = sand.u32 %s40, 1
        %s422 = scalar_lea.sflag [#allocation3], %s421
        %s423 = sand.u32 %s40, 1
        %s424 = smul.addr %s423, 192
        %s425 = scalar_lea.vmem [#allocation2], %s424
        // Predicated region
        $region61: #{tpu_custom_call.1} parent=59 // pred_check
          %p426 = pneg %p53
        $region62: #{tpu_custom_call.1} parent=59 // pred_check_branch
          %428 = sbr.rel (%p426) target = $region64
        $region63: #{tpu_custom_call.1} parent=59 // pred_region
          %429 = dma.done %s422, 3072
        $region64: #{tpu_custom_call.1} parent=59 // pred_fallthru
          _
        %s430 = sand.u32 %s32, 1
        %s431 = scalar_lea.sflag [#allocation6], %s430
        %s432 = sand.u32 %s66, 1
        %s433 = smul.addr %s432, 192
        %s434 = scalar_lea.vmem [#allocation5], %s433
        // Predicated region
        $region65: #{tpu_custom_call.1} parent=59 // pred_check
          %p435 = pneg %p79
        $region66: #{tpu_custom_call.1} parent=59 // pred_check_branch
          %437 = sbr.rel (%p435) target = $region68
        $region67: #{tpu_custom_call.1} parent=59 // pred_region
          %438 = dma.done %s431, 3072
        $region68: #{tpu_custom_call.1} parent=59 // pred_fallthru
          _
        %s439 = sand.u32 %s32, 1
        %s440 = scalar_lea.sflag [#allocation6], %s439
        %s441 = sand.u32 %s92, 1
        %s442 = smul.addr %s441, 192
        %s443 = scalar_lea.vmem [#allocation7], %s442
        // Predicated region
        $region69: #{tpu_custom_call.1} parent=59 // pred_check
          %p444 = pneg %p105
        $region70: #{tpu_custom_call.1} parent=59 // pred_check_branch
          %446 = sbr.rel (%p444) target = $region72
        $region71: #{tpu_custom_call.1} parent=59 // pred_region
          %447 = dma.done %s440, 3072
        $region72: #{tpu_custom_call.1} parent=59 // pred_fallthru
          _
        // Predicated region
        $region73: #{tpu_custom_call.1} parent=59 // pred_check
          %p448 = pneg %p126
        $region74: #{tpu_custom_call.1} parent=59 // pred_check_branch
          %450 = sbr.rel (%p448) target = $region76
        $region75: #{tpu_custom_call.1} parent=59 // pred_region
          %451 = dma.done [#allocation9], 3072
        $region76: #{tpu_custom_call.1} parent=59 // pred_fallthru
          _
        // Predicated region
        $region77: #{tpu_custom_call.1} parent=59 // pred_check
          %p452 = pneg %p189
        $region78: #{tpu_custom_call.1} parent=59 // pred_check_branch
          %454 = sbr.rel (%p452) target = $region80
        $region79: #{tpu_custom_call.1} parent=59 // pred_region
          %455 = dma.done [#allocation9], 6144
        $region80: #{tpu_custom_call.1} parent=59 // pred_fallthru
          _
        // Predicated region
        $region81: #{tpu_custom_call.1} parent=59 // pred_check
          %p456 = pneg %p231
        $region82: #{tpu_custom_call.1} parent=59 // pred_check_branch
          %458 = sbr.rel (%p456) target = $region84
        $region83: #{tpu_custom_call.1} parent=59 // pred_region
          %459 = dma.done [#allocation12], 2048
        $region84: #{tpu_custom_call.1} parent=59 // pred_fallthru
          _
        %s460 = sand.u32 %s40, 1
        %s461 = scalar_lea.sflag [#allocation3], %s460
        %s462 = sand.u32 %s40, 1
        %s463 = smul.addr %s462, 192
        %s464 = scalar_lea.vmem [#allocation2], %s463
        %p465 = pneg %p53
        %p466 = pneg %p50
        %s467 = sand.u32 %s32, 1
        %s468 = scalar_lea.sflag [#allocation6], %s467
        %s469 = sand.u32 %s66, 1
        %s470 = smul.addr %s469, 192
        %s471 = scalar_lea.vmem [#allocation5], %s470
        %p472 = pneg %p79
        %p473 = pneg %p76
        %s474 = sand.u32 %s32, 1
        %s475 = scalar_lea.sflag [#allocation6], %s474
        %s476 = sand.u32 %s92, 1
        %s477 = smul.addr %s476, 192
        %s478 = scalar_lea.vmem [#allocation7], %s477
        %p479 = pneg %p105
        %p480 = pneg %p102
        %p481 = pneg %p126
        %p482 = pneg %p123
        %p483 = pneg %p147
        %p484 = pneg %p144
        %p485 = pneg %p168
        %p486 = pneg %p165
        %p487 = pneg %p189
        %p488 = pneg %p186
        %p489 = pneg %p210
        %p490 = pneg %p207
        %p491 = pneg %p231
        %p492 = pneg %p228
        %p493 = pneg %p252
        %p494 = pneg %p249
        %p495 = pneg %p278
        %p496 = pneg %p275
        %s497 = sand.u32 %s265, 1
        %s498 = scalar_lea.sflag [#allocation4], %s497
        %s499 = sand.u32 %s265, 1
        %s500 = smul.addr %s499, 128
        %s501 = scalar_lea.vmem [#allocation13], %s500
        %s502 = smul.u32 16, %s32
        %s503 = smul.u32 16, %s32
        %s504 = smul.u32 16, %s32
        %s505 = smul.u32 16, %s32
        %v507 = vld [vmem:[%s425] sm:$0xff]
        %v508 = vld [vmem:[%s425 + $0x8] sm:$0xf]
        %v509 = vld [vmem:[%s425 + $0xc] sm:$0xff]
        %v510 = vld [vmem:[%s425 + $0x14] sm:$0xf]
        %v511 = vld [vmem:[%s425 + $0x18] sm:$0xff]
        %v512 = vld [vmem:[%s425 + $0x20] sm:$0xf]
        %v513 = vld [vmem:[%s425 + $0x24] sm:$0xff]
        %v514 = vld [vmem:[%s425 + $0x2c] sm:$0xf]
        %v515 = vld [vmem:[%s425 + $0x30] sm:$0xff]
        %v516 = vld [vmem:[%s425 + $0x38] sm:$0xf]
        %v517 = vld [vmem:[%s425 + $0x3c] sm:$0xff]
        %v518 = vld [vmem:[%s425 + $0x44] sm:$0xf]
        %v519 = vld [vmem:[%s425 + $0x48] sm:$0xff]
        %v520 = vld [vmem:[%s425 + $0x50] sm:$0xf]
        %v521 = vld [vmem:[%s425 + $0x54] sm:$0xff]
        %v522 = vld [vmem:[%s425 + $0x5c] sm:$0xf]
        %v523 = vld [vmem:[%s425 + $0x60] sm:$0xff]
        %v524 = vld [vmem:[%s425 + $0x68] sm:$0xf]
        %v525 = vld [vmem:[%s425 + $0x6c] sm:$0xff]
        %v526 = vld [vmem:[%s425 + $0x74] sm:$0xf]
        %v527 = vld [vmem:[%s425 + $0x78] sm:$0xff]
        %v528 = vld [vmem:[%s425 + $0x80] sm:$0xf]
        %v529 = vld [vmem:[%s425 + $0x84] sm:$0xff]
        %v530 = vld [vmem:[%s425 + $0x8c] sm:$0xf]
        %v531 = vld [vmem:[%s425 + $0x90] sm:$0xff]
        %v532 = vld [vmem:[%s425 + $0x98] sm:$0xf]
        %v533 = vld [vmem:[%s425 + $0x9c] sm:$0xff]
        %v534 = vld [vmem:[%s425 + $0xa4] sm:$0xf]
        %v535 = vld [vmem:[%s425 + $0xa8] sm:$0xff]
        %v536 = vld [vmem:[%s425 + $0xb0] sm:$0xf]
        %v537 = vld [vmem:[%s425 + $0xb4] sm:$0xff]
        %v538 = vld [vmem:[%s425 + $0xbc] sm:$0xf]
        %v539 = vld [vmem:[%s434] sm:$0xff]
        %v540 = vld [vmem:[%s434 + $0x8] sm:$0xf]
        %v541 = vld [vmem:[%s434 + $0xc] sm:$0xff]
        %v542 = vld [vmem:[%s434 + $0x14] sm:$0xf]
        %v543 = vld [vmem:[%s434 + $0x18] sm:$0xff]
        %v544 = vld [vmem:[%s434 + $0x20] sm:$0xf]
        %v545 = vld [vmem:[%s434 + $0x24] sm:$0xff]
        %v546 = vld [vmem:[%s434 + $0x2c] sm:$0xf]
        %v547 = vld [vmem:[%s434 + $0x30] sm:$0xff]
        %v548 = vld [vmem:[%s434 + $0x38] sm:$0xf]
        %v549 = vld [vmem:[%s434 + $0x3c] sm:$0xff]
        %v550 = vld [vmem:[%s434 + $0x44] sm:$0xf]
        %v551 = vld [vmem:[%s434 + $0x48] sm:$0xff]
        %v552 = vld [vmem:[%s434 + $0x50] sm:$0xf]
        %v553 = vld [vmem:[%s434 + $0x54] sm:$0xff]
        %v554 = vld [vmem:[%s434 + $0x5c] sm:$0xf]
        %v555 = vld [vmem:[%s434 + $0x60] sm:$0xff]
        %v556 = vld [vmem:[%s434 + $0x68] sm:$0xf]
        %v557 = vld [vmem:[%s434 + $0x6c] sm:$0xff]
        %v558 = vld [vmem:[%s434 + $0x74] sm:$0xf]
        %v559 = vld [vmem:[%s434 + $0x78] sm:$0xff]
        %v560 = vld [vmem:[%s434 + $0x80] sm:$0xf]
        %v561 = vld [vmem:[%s434 + $0x84] sm:$0xff]
        %v562 = vld [vmem:[%s434 + $0x8c] sm:$0xf]
        %v563 = vld [vmem:[%s434 + $0x90] sm:$0xff]
        %v564 = vld [vmem:[%s434 + $0x98] sm:$0xf]
        %v565 = vld [vmem:[%s434 + $0x9c] sm:$0xff]
        %v566 = vld [vmem:[%s434 + $0xa4] sm:$0xf]
        %v567 = vld [vmem:[%s434 + $0xa8] sm:$0xff]
        %v568 = vld [vmem:[%s434 + $0xb0] sm:$0xf]
        %v569 = vld [vmem:[%s434 + $0xb4] sm:$0xff]
        %v570 = vld [vmem:[%s434 + $0xbc] sm:$0xf]
        %v571 = vld [vmem:[%s443] sm:$0xff]
        %v572 = vld [vmem:[%s443 + $0x8] sm:$0xf]
        %v573 = vld [vmem:[%s443 + $0xc] sm:$0xff]
        %v574 = vld [vmem:[%s443 + $0x14] sm:$0xf]
        %v575 = vld [vmem:[%s443 + $0x18] sm:$0xff]
        %v576 = vld [vmem:[%s443 + $0x20] sm:$0xf]
        %v577 = vld [vmem:[%s443 + $0x24] sm:$0xff]
        %v578 = vld [vmem:[%s443 + $0x2c] sm:$0xf]
        %v579 = vld [vmem:[%s443 + $0x30] sm:$0xff]
        %v580 = vld [vmem:[%s443 + $0x38] sm:$0xf]
        %v581 = vld [vmem:[%s443 + $0x3c] sm:$0xff]
        %v582 = vld [vmem:[%s443 + $0x44] sm:$0xf]
        %v583 = vld [vmem:[%s443 + $0x48] sm:$0xff]
        %v584 = vld [vmem:[%s443 + $0x50] sm:$0xf]
        %v585 = vld [vmem:[%s443 + $0x54] sm:$0xff]
        %v586 = vld [vmem:[%s443 + $0x5c] sm:$0xf]
        %v587 = vld [vmem:[%s443 + $0x60] sm:$0xff]
        %v588 = vld [vmem:[%s443 + $0x68] sm:$0xf]
        %v589 = vld [vmem:[%s443 + $0x6c] sm:$0xff]
        %v590 = vld [vmem:[%s443 + $0x74] sm:$0xf]
        %v591 = vld [vmem:[%s443 + $0x78] sm:$0xff]
        %v592 = vld [vmem:[%s443 + $0x80] sm:$0xf]
        %v593 = vld [vmem:[%s443 + $0x84] sm:$0xff]
        %v594 = vld [vmem:[%s443 + $0x8c] sm:$0xf]
        %v595 = vld [vmem:[%s443 + $0x90] sm:$0xff]
        %v596 = vld [vmem:[%s443 + $0x98] sm:$0xf]
        %v597 = vld [vmem:[%s443 + $0x9c] sm:$0xff]
        %v598 = vld [vmem:[%s443 + $0xa4] sm:$0xf]
        %v599 = vld [vmem:[%s443 + $0xa8] sm:$0xff]
        %v600 = vld [vmem:[%s443 + $0xb0] sm:$0xf]
        %v601 = vld [vmem:[%s443 + $0xb4] sm:$0xff]
        %v602 = vld [vmem:[%s443 + $0xbc] sm:$0xf]
        %v635 = vunpack.c.l.b16 %v507
        %v636 = vunpack.c.h.b16 %v507
        %v637 = vunpack.c.l.b16 %v508
        %v638 = vunpack.c.l.b16 %v509
        %v639 = vunpack.c.h.b16 %v509
        %v640 = vunpack.c.l.b16 %v510
        %v641 = vunpack.c.l.b16 %v511
        %v642 = vunpack.c.h.b16 %v511
        %v643 = vunpack.c.l.b16 %v512
        %v644 = vunpack.c.l.b16 %v513
        %v645 = vunpack.c.h.b16 %v513
        %v646 = vunpack.c.l.b16 %v514
        %v647 = vunpack.c.l.b16 %v515
        %v648 = vunpack.c.h.b16 %v515
        %v649 = vunpack.c.l.b16 %v516
        %v650 = vunpack.c.l.b16 %v517
        %v651 = vunpack.c.h.b16 %v517
        %v652 = vunpack.c.l.b16 %v518
        %v653 = vunpack.c.l.b16 %v519
        %v654 = vunpack.c.h.b16 %v519
        %v655 = vunpack.c.l.b16 %v520
        %v656 = vunpack.c.l.b16 %v521
        %v657 = vunpack.c.h.b16 %v521
        %v658 = vunpack.c.l.b16 %v522
        %v659 = vunpack.c.l.b16 %v523
        %v660 = vunpack.c.h.b16 %v523
        %v661 = vunpack.c.l.b16 %v524
        %v662 = vunpack.c.l.b16 %v525
        %v663 = vunpack.c.h.b16 %v525
        %v664 = vunpack.c.l.b16 %v526
        %v665 = vunpack.c.l.b16 %v527
        %v666 = vunpack.c.h.b16 %v527
        %v667 = vunpack.c.l.b16 %v528
        %v668 = vunpack.c.l.b16 %v529
        %v669 = vunpack.c.h.b16 %v529
        %v670 = vunpack.c.l.b16 %v530
        %v671 = vunpack.c.l.b16 %v531
        %v672 = vunpack.c.h.b16 %v531
        %v673 = vunpack.c.l.b16 %v532
        %v674 = vunpack.c.l.b16 %v533
        %v675 = vunpack.c.h.b16 %v533
        %v676 = vunpack.c.l.b16 %v534
        %v677 = vunpack.c.l.b16 %v535
        %v678 = vunpack.c.h.b16 %v535
        %v679 = vunpack.c.l.b16 %v536
        %v680 = vunpack.c.l.b16 %v537
        %v681 = vunpack.c.h.b16 %v537
        %v682 = vunpack.c.l.b16 %v538
        %v683 = vpack.c.b16 %v638, %v635
        %v684 = vpack.c.b16 %v639, %v636
        %v685 = vpack.c.b16 %v640, %v637
        %v686 = vpack.c.b16 %v644, %v641
        %v687 = vpack.c.b16 %v645, %v642
        %v688 = vpack.c.b16 %v646, %v643
        %v689 = vpack.c.b16 %v650, %v647
        %v690 = vpack.c.b16 %v651, %v648
        %v691 = vpack.c.b16 %v652, %v649
        %v692 = vpack.c.b16 %v656, %v653
        %v693 = vpack.c.b16 %v657, %v654
        %v694 = vpack.c.b16 %v658, %v655
        %v695 = vpack.c.b16 %v662, %v659
        %v696 = vpack.c.b16 %v663, %v660
        %v697 = vpack.c.b16 %v664, %v661
        %v698 = vpack.c.b16 %v668, %v665
        %v699 = vpack.c.b16 %v669, %v666
        %v700 = vpack.c.b16 %v670, %v667
        %v701 = vpack.c.b16 %v674, %v671
        %v702 = vpack.c.b16 %v675, %v672
        %v703 = vpack.c.b16 %v676, %v673
        %v704 = vpack.c.b16 %v680, %v677
        %v705 = vpack.c.b16 %v681, %v678
        %v706 = vpack.c.b16 %v682, %v679
        %v763 = vunpack.c.l.b16 %v539
        %v764 = vunpack.c.h.b16 %v539
        %v765 = vunpack.c.l.b16 %v540
        %v766 = vunpack.c.l.b16 %v541
        %v767 = vunpack.c.h.b16 %v541
        %v768 = vunpack.c.l.b16 %v542
        %v769 = vunpack.c.l.b16 %v543
        %v770 = vunpack.c.h.b16 %v543
        %v771 = vunpack.c.l.b16 %v544
        %v772 = vunpack.c.l.b16 %v545
        %v773 = vunpack.c.h.b16 %v545
        %v774 = vunpack.c.l.b16 %v546
        %v775 = vunpack.c.l.b16 %v547
        %v776 = vunpack.c.h.b16 %v547
        %v777 = vunpack.c.l.b16 %v548
        %v778 = vunpack.c.l.b16 %v549
        %v779 = vunpack.c.h.b16 %v549
        %v780 = vunpack.c.l.b16 %v550
        %v781 = vunpack.c.l.b16 %v551
        %v782 = vunpack.c.h.b16 %v551
        %v783 = vunpack.c.l.b16 %v552
        %v784 = vunpack.c.l.b16 %v553
        %v785 = vunpack.c.h.b16 %v553
        %v786 = vunpack.c.l.b16 %v554
        %v787 = vunpack.c.l.b16 %v555
        %v788 = vunpack.c.h.b16 %v555
        %v789 = vunpack.c.l.b16 %v556
        %v790 = vunpack.c.l.b16 %v557
        %v791 = vunpack.c.h.b16 %v557
        %v792 = vunpack.c.l.b16 %v558
        %v793 = vunpack.c.l.b16 %v559
        %v794 = vunpack.c.h.b16 %v559
        %v795 = vunpack.c.l.b16 %v560
        %v796 = vunpack.c.l.b16 %v561
        %v797 = vunpack.c.h.b16 %v561
        %v798 = vunpack.c.l.b16 %v562
        %v799 = vunpack.c.l.b16 %v563
        %v800 = vunpack.c.h.b16 %v563
        %v801 = vunpack.c.l.b16 %v564
        %v802 = vunpack.c.l.b16 %v565
        %v803 = vunpack.c.h.b16 %v565
        %v804 = vunpack.c.l.b16 %v566
        %v805 = vunpack.c.l.b16 %v567
        %v806 = vunpack.c.h.b16 %v567
        %v807 = vunpack.c.l.b16 %v568
        %v808 = vunpack.c.l.b16 %v569
        %v809 = vunpack.c.h.b16 %v569
        %v810 = vunpack.c.l.b16 %v570
        %v811 = vpack.c.b16 %v766, %v763
        %v812 = vpack.c.b16 %v767, %v764
        %v813 = vpack.c.b16 %v768, %v765
        %v814 = vpack.c.b16 %v772, %v769
        %v815 = vpack.c.b16 %v773, %v770
        %v816 = vpack.c.b16 %v774, %v771
        %v817 = vpack.c.b16 %v778, %v775
        %v818 = vpack.c.b16 %v779, %v776
        %v819 = vpack.c.b16 %v780, %v777
        %v820 = vpack.c.b16 %v784, %v781
        %v821 = vpack.c.b16 %v785, %v782
        %v822 = vpack.c.b16 %v786, %v783
        %v823 = vpack.c.b16 %v790, %v787
        %v824 = vpack.c.b16 %v791, %v788
        %v825 = vpack.c.b16 %v792, %v789
        %v826 = vpack.c.b16 %v796, %v793
        %v827 = vpack.c.b16 %v797, %v794
        %v828 = vpack.c.b16 %v798, %v795
        %v829 = vpack.c.b16 %v802, %v799
        %v830 = vpack.c.b16 %v803, %v800
        %v831 = vpack.c.b16 %v804, %v801
        %v832 = vpack.c.b16 %v808, %v805
        %v833 = vpack.c.b16 %v809, %v806
        %v834 = vpack.c.b16 %v810, %v807
        %v859 = vld [vmem:[#allocation8] sm:$0xf]
        %v860 = vld [vmem:[#allocation8 + $0x4] sm:$0xf]
        %v861 = vld [vmem:[#allocation8 + $0x8] sm:$0xf]
        %v862 = vld [vmem:[#allocation8 + $0xc] sm:$0xf]
        %v863 = vld [vmem:[#allocation8 + $0x10] sm:$0xf]
        %v864 = vld [vmem:[#allocation8 + $0x14] sm:$0xf]
        %v865 = vld [vmem:[#allocation8 + $0x18] sm:$0xf]
        %v866 = vld [vmem:[#allocation8 + $0x1c] sm:$0xf]
        %v867 = vld [vmem:[#allocation8 + $0x20] sm:$0xf]
        %v868 = vld [vmem:[#allocation8 + $0x24] sm:$0xf]
        %v869 = vld [vmem:[#allocation8 + $0x28] sm:$0xf]
        %v870 = vld [vmem:[#allocation8 + $0x2c] sm:$0xf]
        %v871 = vld [vmem:[#allocation8 + $0x30] sm:$0xf]
        %v872 = vld [vmem:[#allocation8 + $0x34] sm:$0xf]
        %v873 = vld [vmem:[#allocation8 + $0x38] sm:$0xf]
        %v874 = vld [vmem:[#allocation8 + $0x3c] sm:$0xf]
        %v875 = vld [vmem:[#allocation8 + $0x40] sm:$0xf]
        %v876 = vld [vmem:[#allocation8 + $0x44] sm:$0xf]
        %v877 = vld [vmem:[#allocation8 + $0x48] sm:$0xf]
        %v878 = vld [vmem:[#allocation8 + $0x4c] sm:$0xf]
        %v879 = vld [vmem:[#allocation8 + $0x50] sm:$0xf]
        %v880 = vld [vmem:[#allocation8 + $0x54] sm:$0xf]
        %v881 = vld [vmem:[#allocation8 + $0x58] sm:$0xf]
        %v882 = vld [vmem:[#allocation8 + $0x5c] sm:$0xf]
        %v883 = vld [vmem:[#allocation8 + $0x60] sm:$0xf]
        %v884 = vld [vmem:[#allocation8 + $0x64] sm:$0xf]
        %v885 = vld [vmem:[#allocation8 + $0x68] sm:$0xf]
        %v886 = vld [vmem:[#allocation8 + $0x6c] sm:$0xf]
        %v887 = vld [vmem:[#allocation8 + $0x70] sm:$0xf]
        %v888 = vld [vmem:[#allocation8 + $0x74] sm:$0xf]
        %v889 = vld [vmem:[#allocation8 + $0x78] sm:$0xf]
        %v890 = vld [vmem:[#allocation8 + $0x7c] sm:$0xf]
        %v891 = vld [vmem:[#allocation8 + $0x80] sm:$0xf]
        %v892 = vld [vmem:[#allocation8 + $0x84] sm:$0xf]
        %v893 = vld [vmem:[#allocation8 + $0x88] sm:$0xf]
        %v894 = vld [vmem:[#allocation8 + $0x8c] sm:$0xf]
        %v895 = vld [vmem:[#allocation8 + $0x90] sm:$0xf]
        %v896 = vld [vmem:[#allocation8 + $0x94] sm:$0xf]
        %v897 = vld [vmem:[#allocation8 + $0x98] sm:$0xf]
        %v898 = vld [vmem:[#allocation8 + $0x9c] sm:$0xf]
        %v899 = vld [vmem:[#allocation8 + $0xa0] sm:$0xf]
        %v900 = vld [vmem:[#allocation8 + $0xa4] sm:$0xf]
        %v901 = vld [vmem:[#allocation8 + $0xa8] sm:$0xf]
        %v902 = vld [vmem:[#allocation8 + $0xac] sm:$0xf]
        %v903 = vld [vmem:[#allocation8 + $0xb0] sm:$0xf]
        %v904 = vld [vmem:[#allocation8 + $0xb4] sm:$0xf]
        %v905 = vld [vmem:[#allocation8 + $0xb8] sm:$0xf]
        %v906 = vld [vmem:[#allocation8 + $0xbc] sm:$0xf]
        %v907 = vld [vmem:[%s4] sm:$0x1]
        %v909 = vlaneseq
        %v910 = vshrl.u32 %v909, 7
        %v911 = vsub.s32 0, %v910
        %v912 = vrot.slane %v907, %v911
        %v962 = vunpack.c.l.b16 %v859
        %v963 = vunpack.c.l.b16 %v860
        %v964 = vunpack.c.l.b16 %v861
        %v965 = vunpack.c.l.b16 %v862
        %v966 = vunpack.c.l.b16 %v863
        %v967 = vunpack.c.l.b16 %v864
        %v968 = vunpack.c.l.b16 %v865
        %v969 = vunpack.c.l.b16 %v866
        %v970 = vunpack.c.l.b16 %v867
        %v971 = vunpack.c.l.b16 %v868
        %v972 = vunpack.c.l.b16 %v869
        %v973 = vunpack.c.l.b16 %v870
        %v974 = vunpack.c.l.b16 %v871
        %v975 = vunpack.c.l.b16 %v872
        %v976 = vunpack.c.l.b16 %v873
        %v977 = vunpack.c.l.b16 %v874
        %v978 = vunpack.c.l.b16 %v875
        %v979 = vunpack.c.l.b16 %v876
        %v980 = vunpack.c.l.b16 %v877
        %v981 = vunpack.c.l.b16 %v878
        %v982 = vunpack.c.l.b16 %v879
        %v983 = vunpack.c.l.b16 %v880
        %v984 = vunpack.c.l.b16 %v881
        %v985 = vunpack.c.l.b16 %v882
        %v986 = vunpack.c.l.b16 %v883
        %v987 = vunpack.c.l.b16 %v884
        %v988 = vunpack.c.l.b16 %v885
        %v989 = vunpack.c.l.b16 %v886
        %v990 = vunpack.c.l.b16 %v887
        %v991 = vunpack.c.l.b16 %v888
        %v992 = vunpack.c.l.b16 %v889
        %v993 = vunpack.c.l.b16 %v890
        %v994 = vunpack.c.l.b16 %v891
        %v995 = vunpack.c.l.b16 %v892
        %v996 = vunpack.c.l.b16 %v893
        %v997 = vunpack.c.l.b16 %v894
        %v998 = vunpack.c.l.b16 %v895
        %v999 = vunpack.c.l.b16 %v896
        %v1000 = vunpack.c.l.b16 %v897
        %v1001 = vunpack.c.l.b16 %v898
        %v1002 = vunpack.c.l.b16 %v899
        %v1003 = vunpack.c.l.b16 %v900
        %v1004 = vunpack.c.l.b16 %v901
        %v1005 = vunpack.c.l.b16 %v902
        %v1006 = vunpack.c.l.b16 %v903
        %v1007 = vunpack.c.l.b16 %v904
        %v1008 = vunpack.c.l.b16 %v905
        %v1009 = vunpack.c.l.b16 %v906
        %v1010 = vpack.c.b16 %v963, %v962
        %v1011 = vpack.c.b16 %v965, %v964
        %v1012 = vpack.c.b16 %v967, %v966
        %v1013 = vpack.c.b16 %v969, %v968
        %v1014 = vpack.c.b16 %v971, %v970
        %v1015 = vpack.c.b16 %v973, %v972
        %v1016 = vpack.c.b16 %v975, %v974
        %v1017 = vpack.c.b16 %v977, %v976
        %v1018 = vpack.c.b16 %v979, %v978
        %v1019 = vpack.c.b16 %v981, %v980
        %v1020 = vpack.c.b16 %v983, %v982
        %v1021 = vpack.c.b16 %v985, %v984
        %v1022 = vpack.c.b16 %v987, %v986
        %v1023 = vpack.c.b16 %v989, %v988
        %v1024 = vpack.c.b16 %v991, %v990
        %v1025 = vpack.c.b16 %v993, %v992
        %v1026 = vpack.c.b16 %v995, %v994
        %v1027 = vpack.c.b16 %v997, %v996
        %v1028 = vpack.c.b16 %v999, %v998
        %v1029 = vpack.c.b16 %v1001, %v1000
        %v1030 = vpack.c.b16 %v1003, %v1002
        %v1031 = vpack.c.b16 %v1005, %v1004
        %v1032 = vpack.c.b16 %v1007, %v1006
        %v1033 = vpack.c.b16 %v1009, %v1008
        %1058 = vmatprep.subr.bf16.mxu0 0
        %1059 = vmatpush1.bf16.msra.mxu0 %v1010
        %1060 = vmatprep.subr.bf16.mxu0 0
        %1061 = vmatpush1.bf16.msra.mxu0 %v1011
        %1062 = vmatprep.subr.bf16.mxu0 0
        %1063 = vmatpush1.bf16.msra.mxu0 %v1012
        %1064 = vmatprep.subr.bf16.mxu0 0
        %1065 = vmatpush1.bf16.msra.mxu0 %v1013
        %1066 = vmatprep.subr.bf16.mxu0 0
        %1067 = vmatpush1.bf16.msra.mxu0 %v1014
        %1068 = vmatprep.subr.bf16.mxu0 0
        %1069 = vmatpush1.bf16.msra.mxu0 %v1015
        %1070 = vmatprep.subr.bf16.mxu0 0
        %1071 = vmatpush1.bf16.msra.mxu0 %v1016
        %1072 = vmatprep.subr.bf16.mxu0 0
        %1073 = vmatpush1.bf16.msra.mxu0 %v1017
        %1074 = vmatprep.subr.bf16.mxu0 0
        %1075 = vmatpush1.bf16.msra.mxu0 %v1018
        %1076 = vmatprep.subr.bf16.mxu0 0
        %1077 = vmatpush1.bf16.msra.mxu0 %v1019
        %1078 = vmatprep.subr.bf16.mxu0 0
        %1079 = vmatpush1.bf16.msra.mxu0 %v1020
        %1080 = vmatprep.subr.bf16.mxu0 0
        %1081 = vmatpush1.bf16.msra.mxu0 %v1021
        %1082 = vmatprep.subr.bf16.mxu0 0
        %1083 = vmatpush1.bf16.msra.mxu0 %v1022
        %1084 = vmatprep.subr.bf16.mxu0 0
        %1085 = vmatpush1.bf16.msra.mxu0 %v1023
        %1086 = vmatprep.subr.bf16.mxu0 0
        %1087 = vmatpush1.bf16.msra.mxu0 %v1024
        %1088 = vmatprep.subr.bf16.mxu0 0
        %1089 = vmatpush1.bf16.msra.mxu0 %v1025
        %1090 = vmatprep.mubr.bf16.mxu0 %v684
        %1091 = vmatmul.mubr.bf16.gmra.mrb[0].mxu0 %v683
        %v1092 = vpop.f32.mrb[0].mxu0
        %v1093 = vadd.f32 %v912, %v1092
        %v1094 = vpop.f32.mrb[0].mxu0
        %v1095 = vpop.f32.mrb[0].mxu0
        %v1096 = vadd.f32 %v912, %v1095
        %v1097 = vpop.f32.mrb[0].mxu0
        %1098 = vmatprep.mubr.bf16.mxu0 %v687
        %1099 = vmatmul.mubr.bf16.gmra.mrb[0].mxu0 %v686
        %v1100 = vpop.f32.mrb[0].mxu0
        %v1101 = vadd.f32 %v912, %v1100
        %v1102 = vpop.f32.mrb[0].mxu0
        %v1103 = vpop.f32.mrb[0].mxu0
        %v1104 = vadd.f32 %v912, %v1103
        %v1105 = vpop.f32.mrb[0].mxu0
        %1106 = vmatprep.mubr.bf16.mxu0 %v690
        %1107 = vmatmul.mubr.bf16.gmra.mrb[0].mxu0 %v689
        %v1108 = vpop.f32.mrb[0].mxu0
        %v1109 = vadd.f32 %v912, %v1108
        %v1110 = vpop.f32.mrb[0].mxu0
        %v1111 = vpop.f32.mrb[0].mxu0
        %v1112 = vadd.f32 %v912, %v1111
        %v1113 = vpop.f32.mrb[0].mxu0
        %1114 = vmatprep.mubr.bf16.mxu0 %v693
        %1115 = vmatmul.mubr.bf16.gmra.mrb[0].mxu0 %v692
        %v1116 = vpop.f32.mrb[0].mxu0
        %v1117 = vadd.f32 %v912, %v1116
        %v1118 = vpop.f32.mrb[0].mxu0
        %v1119 = vpop.f32.mrb[0].mxu0
        %v1120 = vadd.f32 %v912, %v1119
        %v1121 = vpop.f32.mrb[0].mxu0
        %1122 = vmatprep.mubr.bf16.mxu0 %v696
        %1123 = vmatmul.mubr.bf16.gmra.mrb[0].mxu0 %v695
        %v1124 = vpop.f32.mrb[0].mxu0
        %v1125 = vadd.f32 %v912, %v1124
        %v1126 = vpop.f32.mrb[0].mxu0
        %v1127 = vpop.f32.mrb[0].mxu0
        %v1128 = vadd.f32 %v912, %v1127
        %v1129 = vpop.f32.mrb[0].mxu0
        %1130 = vmatprep.mubr.bf16.mxu0 %v699
        %1131 = vmatmul.mubr.bf16.gmra.mrb[0].mxu0 %v698
        %v1132 = vpop.f32.mrb[0].mxu0
        %v1133 = vadd.f32 %v912, %v1132
        %v1134 = vpop.f32.mrb[0].mxu0
        %v1135 = vpop.f32.mrb[0].mxu0
        %v1136 = vadd.f32 %v912, %v1135
        %v1137 = vpop.f32.mrb[0].mxu0
        %1138 = vmatprep.mubr.bf16.mxu0 %v702
        %1139 = vmatmul.mubr.bf16.gmra.mrb[0].mxu0 %v701
        %v1140 = vpop.f32.mrb[0].mxu0
        %v1141 = vadd.f32 %v912, %v1140
        %v1142 = vpop.f32.mrb[0].mxu0
        %v1143 = vpop.f32.mrb[0].mxu0
        %v1144 = vadd.f32 %v912, %v1143
        %v1145 = vpop.f32.mrb[0].mxu0
        %1146 = vmatprep.mubr.bf16.mxu0 %v705
        %1147 = vmatmul.mubr.bf16.gmra.mrb[0].mxu0 %v704
        %v1148 = vpop.f32.mrb[0].mxu0
        %v1149 = vadd.f32 %v912, %v1148
        %v1150 = vpop.f32.mrb[0].mxu0
        %v1151 = vpop.f32.mrb[0].mxu0
        %v1152 = vadd.f32 %v912, %v1151
        %v1153 = vpop.f32.mrb[0].mxu0
        %1154 = vmatprep.mubr.bf16.mxu0 %v812
        %1155 = vmatmul.mubr.bf16.gmra.mrb[0].mxu0 %v811
        %v1156 = vpop.f32.mrb[0].mxu0
        %v1157 = vadd.f32 %v912, %v1156
        %v1158 = vpop.f32.mrb[0].mxu0
        %v1159 = vpop.f32.mrb[0].mxu0
        %v1160 = vadd.f32 %v912, %v1159
        %v1161 = vpop.f32.mrb[0].mxu0
        %1162 = vmatprep.mubr.bf16.mxu0 %v815
        %1163 = vmatmul.mubr.bf16.gmra.mrb[0].mxu0 %v814
        %v1164 = vpop.f32.mrb[0].mxu0
        %v1165 = vadd.f32 %v912, %v1164
        %v1166 = vpop.f32.mrb[0].mxu0
        %v1167 = vpop.f32.mrb[0].mxu0
        %v1168 = vadd.f32 %v912, %v1167
        %v1169 = vpop.f32.mrb[0].mxu0
        %1170 = vmatprep.mubr.bf16.mxu0 %v818
        %1171 = vmatmul.mubr.bf16.gmra.mrb[0].mxu0 %v817
        %v1172 = vpop.f32.mrb[0].mxu0
        %v1173 = vadd.f32 %v912, %v1172
        %v1174 = vpop.f32.mrb[0].mxu0
        %v1175 = vpop.f32.mrb[0].mxu0
        %v1176 = vadd.f32 %v912, %v1175
        %v1177 = vpop.f32.mrb[0].mxu0
        %1178 = vmatprep.mubr.bf16.mxu0 %v821
        %1179 = vmatmul.mubr.bf16.gmra.mrb[0].mxu0 %v820
        %v1180 = vpop.f32.mrb[0].mxu0
        %v1181 = vadd.f32 %v912, %v1180
        %v1182 = vpop.f32.mrb[0].mxu0
        %v1183 = vpop.f32.mrb[0].mxu0
        %v1184 = vadd.f32 %v912, %v1183
        %v1185 = vpop.f32.mrb[0].mxu0
        %1186 = vmatprep.mubr.bf16.mxu0 %v824
        %1187 = vmatmul.mubr.bf16.gmra.mrb[0].mxu0 %v823
        %v1188 = vpop.f32.mrb[0].mxu0
        %v1189 = vadd.f32 %v912, %v1188
        %v1190 = vpop.f32.mrb[0].mxu0
        %v1191 = vpop.f32.mrb[0].mxu0
        %v1192 = vadd.f32 %v912, %v1191
        %v1193 = vpop.f32.mrb[0].mxu0
        %1194 = vmatprep.mubr.bf16.mxu0 %v827
        %1195 = vmatmul.mubr.bf16.gmra.mrb[0].mxu0 %v826
        %v1196 = vpop.f32.mrb[0].mxu0
        %v1197 = vadd.f32 %v912, %v1196
        %v1198 = vpop.f32.mrb[0].mxu0
        %v1199 = vpop.f32.mrb[0].mxu0
        %v1200 = vadd.f32 %v912, %v1199
        %v1201 = vpop.f32.mrb[0].mxu0
        %1202 = vmatprep.mubr.bf16.mxu0 %v830
        %1203 = vmatmul.mubr.bf16.gmra.mrb[0].mxu0 %v829
        %v1204 = vpop.f32.mrb[0].mxu0
        %v1205 = vadd.f32 %v912, %v1204
        %v1206 = vpop.f32.mrb[0].mxu0
        %v1207 = vpop.f32.mrb[0].mxu0
        %v1208 = vadd.f32 %v912, %v1207
        %v1209 = vpop.f32.mrb[0].mxu0
        %1210 = vmatprep.mubr.bf16.mxu0 %v833
        %1211 = vmatmul.mubr.bf16.gmra.mrb[0].mxu0 %v832
        %v1212 = vpop.f32.mrb[0].mxu0
        %v1213 = vadd.f32 %v912, %v1212
        %v1214 = vpop.f32.mrb[0].mxu0
        %v1215 = vpop.f32.mrb[0].mxu0
        %v1216 = vadd.f32 %v912, %v1215
        %v1217 = vpop.f32.mrb[0].mxu0
        %1218 = vdwg.mxu0
        %1219 = vmatprep.subr.bf16.mxu0 0
        %1220 = vmatpush1.bf16.msra.mxu0 %v1026
        %1221 = vmatprep.subr.bf16.mxu0 0
        %1222 = vmatpush1.bf16.msra.mxu0 %v1027
        %1223 = vmatprep.subr.bf16.mxu0 0
        %1224 = vmatpush1.bf16.msra.mxu0 %v1028
        %1225 = vmatprep.subr.bf16.mxu0 0
        %1226 = vmatpush1.bf16.msra.mxu0 %v1029
        %1227 = vmatprep.subr.bf16.mxu0 0
        %1228 = vmatpush1.bf16.msra.mxu0 %v1030
        %1229 = vmatprep.subr.bf16.mxu0 0
        %1230 = vmatpush1.bf16.msra.mxu0 %v1031
        %1231 = vmatprep.subr.bf16.mxu0 0
        %1232 = vmatpush1.bf16.msra.mxu0 %v1032
        %1233 = vmatprep.subr.bf16.mxu0 0
        %1234 = vmatpush1.bf16.msra.mxu0 %v1033
        %1235 = vmatprep.subr.bf16.mxu0 0
        %1236 = vmatpush1.bf16.msra.mxu0 0
        %1237 = vmatprep.subr.bf16.mxu0 0
        %1238 = vmatpush1.bf16.msra.mxu0 0
        %1239 = vmatprep.subr.bf16.mxu0 0
        %1240 = vmatpush1.bf16.msra.mxu0 0
        %1241 = vmatprep.subr.bf16.mxu0 0
        %1242 = vmatpush1.bf16.msra.mxu0 0
        %1243 = vmatprep.subr.bf16.mxu0 0
        %1244 = vmatpush1.bf16.msra.mxu0 0
        %1245 = vmatprep.subr.bf16.mxu0 0
        %1246 = vmatpush1.bf16.msra.mxu0 0
        %1247 = vmatprep.subr.bf16.mxu0 0
        %1248 = vmatpush1.bf16.msra.mxu0 0
        %1249 = vmatprep.subr.bf16.mxu0 0
        %1250 = vmatpush1.bf16.msra.mxu0 0
        %1251 = vmatprep.mubr.bf16.mxu0 0
        %1252 = vmatmul.mubr.bf16.gmra.mrb[0].mxu0 %v685
        %v1253 = vpop.f32.mrb[0].mxu0
        %v1254 = vadd.f32 %v1093, %v1253
        %v1255 = vpop.f32.mrb[0].mxu0
        %v1256 = vpop.f32.mrb[0].mxu0
        %v1257 = vadd.f32 %v1096, %v1256
        %v1258 = vpop.f32.mrb[0].mxu0
        %1259 = vmatprep.mubr.bf16.mxu0 0
        %1260 = vmatmul.mubr.bf16.gmra.mrb[0].mxu0 %v688
        %v1261 = vpop.f32.mrb[0].mxu0
        %v1262 = vadd.f32 %v1101, %v1261
        %v1263 = vpop.f32.mrb[0].mxu0
        %v1264 = vpop.f32.mrb[0].mxu0
        %v1265 = vadd.f32 %v1104, %v1264
        %v1266 = vpop.f32.mrb[0].mxu0
        %1267 = vmatprep.mubr.bf16.mxu0 0
        %1268 = vmatmul.mubr.bf16.gmra.mrb[0].mxu0 %v691
        %v1269 = vpop.f32.mrb[0].mxu0
        %v1270 = vadd.f32 %v1109, %v1269
        %v1271 = vpop.f32.mrb[0].mxu0
        %v1272 = vpop.f32.mrb[0].mxu0
        %v1273 = vadd.f32 %v1112, %v1272
        %v1274 = vpop.f32.mrb[0].mxu0
        %1275 = vmatprep.mubr.bf16.mxu0 0
        %1276 = vmatmul.mubr.bf16.gmra.mrb[0].mxu0 %v694
        %v1277 = vpop.f32.mrb[0].mxu0
        %v1278 = vadd.f32 %v1117, %v1277
        %v1279 = vpop.f32.mrb[0].mxu0
        %v1280 = vpop.f32.mrb[0].mxu0
        %v1281 = vadd.f32 %v1120, %v1280
        %v1282 = vpop.f32.mrb[0].mxu0
        %1283 = vmatprep.mubr.bf16.mxu0 0
        %1284 = vmatmul.mubr.bf16.gmra.mrb[0].mxu0 %v697
        %v1285 = vpop.f32.mrb[0].mxu0
        %v1286 = vadd.f32 %v1125, %v1285
        %v1287 = vpop.f32.mrb[0].mxu0
        %v1288 = vpop.f32.mrb[0].mxu0
        %v1289 = vadd.f32 %v1128, %v1288
        %v1290 = vpop.f32.mrb[0].mxu0
        %1291 = vmatprep.mubr.bf16.mxu0 0
        %1292 = vmatmul.mubr.bf16.gmra.mrb[0].mxu0 %v700
        %v1293 = vpop.f32.mrb[0].mxu0
        %v1294 = vadd.f32 %v1133, %v1293
        %v1295 = vpop.f32.mrb[0].mxu0
        %v1296 = vpop.f32.mrb[0].mxu0
        %v1297 = vadd.f32 %v1136, %v1296
        %v1298 = vpop.f32.mrb[0].mxu0
        %1299 = vmatprep.mubr.bf16.mxu0 0
        %1300 = vmatmul.mubr.bf16.gmra.mrb[0].mxu0 %v703
        %v1301 = vpop.f32.mrb[0].mxu0
        %v1302 = vadd.f32 %v1141, %v1301
        %v1303 = vpop.f32.mrb[0].mxu0
        %v1304 = vpop.f32.mrb[0].mxu0
        %v1305 = vadd.f32 %v1144, %v1304
        %v1306 = vpop.f32.mrb[0].mxu0
        %1307 = vmatprep.mubr.bf16.mxu0 0
        %1308 = vmatmul.mubr.bf16.gmra.mrb[0].mxu0 %v706
        %v1309 = vpop.f32.mrb[0].mxu0
        %v1310 = vadd.f32 %v1149, %v1309
        %v1311 = vpop.f32.mrb[0].mxu0
        %v1312 = vpop.f32.mrb[0].mxu0
        %v1313 = vadd.f32 %v1152, %v1312
        %v1314 = vpop.f32.mrb[0].mxu0
        %1315 = vmatprep.mubr.bf16.mxu0 0
        %1316 = vmatmul.mubr.bf16.gmra.mrb[0].mxu0 %v813
        %v1317 = vpop.f32.mrb[0].mxu0
        %v1318 = vadd.f32 %v1157, %v1317
        %v1319 = vpop.f32.mrb[0].mxu0
        %v1320 = vpop.f32.mrb[0].mxu0
        %v1321 = vadd.f32 %v1160, %v1320
        %v1322 = vpop.f32.mrb[0].mxu0
        %1323 = vmatprep.mubr.bf16.mxu0 0
        %1324 = vmatmul.mubr.bf16.gmra.mrb[0].mxu0 %v816
        %v1325 = vpop.f32.mrb[0].mxu0
        %v1326 = vadd.f32 %v1165, %v1325
        %v1327 = vpop.f32.mrb[0].mxu0
        %v1328 = vpop.f32.mrb[0].mxu0
        %v1329 = vadd.f32 %v1168, %v1328
        %v1330 = vpop.f32.mrb[0].mxu0
        %1331 = vmatprep.mubr.bf16.mxu0 0
        %1332 = vmatmul.mubr.bf16.gmra.mrb[0].mxu0 %v819
        %v1333 = vpop.f32.mrb[0].mxu0
        %v1334 = vadd.f32 %v1173, %v1333
        %v1335 = vpop.f32.mrb[0].mxu0
        %v1336 = vpop.f32.mrb[0].mxu0
        %v1337 = vadd.f32 %v1176, %v1336
        %v1338 = vpop.f32.mrb[0].mxu0
        %1339 = vmatprep.mubr.bf16.mxu0 0
        %1340 = vmatmul.mubr.bf16.gmra.mrb[0].mxu0 %v822
        %v1341 = vpop.f32.mrb[0].mxu0
        %v1342 = vadd.f32 %v1181, %v1341
        %v1343 = vpop.f32.mrb[0].mxu0
        %v1344 = vpop.f32.mrb[0].mxu0
        %v1345 = vadd.f32 %v1184, %v1344
        %v1346 = vpop.f32.mrb[0].mxu0
        %1347 = vmatprep.mubr.bf16.mxu0 0
        %1348 = vmatmul.mubr.bf16.gmra.mrb[0].mxu0 %v825
        %v1349 = vpop.f32.mrb[0].mxu0
        %v1350 = vadd.f32 %v1189, %v1349
        %v1351 = vpop.f32.mrb[0].mxu0
        %v1352 = vpop.f32.mrb[0].mxu0
        %v1353 = vadd.f32 %v1192, %v1352
        %v1354 = vpop.f32.mrb[0].mxu0
        %1355 = vmatprep.mubr.bf16.mxu0 0
        %1356 = vmatmul.mubr.bf16.gmra.mrb[0].mxu0 %v828
        %v1357 = vpop.f32.mrb[0].mxu0
        %v1358 = vadd.f32 %v1197, %v1357
        %v1359 = vpop.f32.mrb[0].mxu0
        %v1360 = vpop.f32.mrb[0].mxu0
        %v1361 = vadd.f32 %v1200, %v1360
        %v1362 = vpop.f32.mrb[0].mxu0
        %1363 = vmatprep.mubr.bf16.mxu0 0
        %1364 = vmatmul.mubr.bf16.gmra.mrb[0].mxu0 %v831
        %v1365 = vpop.f32.mrb[0].mxu0
        %v1366 = vadd.f32 %v1205, %v1365
        %v1367 = vpop.f32.mrb[0].mxu0
        %v1368 = vpop.f32.mrb[0].mxu0
        %v1369 = vadd.f32 %v1208, %v1368
        %v1370 = vpop.f32.mrb[0].mxu0
        %1371 = vmatprep.mubr.bf16.mxu0 0
        %1372 = vmatmul.mubr.bf16.gmra.mrb[0].mxu0 %v834
        %v1373 = vpop.f32.mrb[0].mxu0
        %v1374 = vadd.f32 %v1213, %v1373
        %v1375 = vpop.f32.mrb[0].mxu0
        %v1376 = vpop.f32.mrb[0].mxu0
        %v1377 = vadd.f32 %v1216, %v1376
        %v1378 = vpop.f32.mrb[0].mxu0
        %1379 = vdwg.mxu0
        %v1380 = vmax.f32 %v1254, 0.0
        %v1381 = vmax.f32 %v1257, 0.0
        %v1382 = vmax.f32 %v1262, 0.0
        %v1383 = vmax.f32 %v1265, 0.0
        %v1384 = vmax.f32 %v1270, 0.0
        %v1385 = vmax.f32 %v1273, 0.0
        %v1386 = vmax.f32 %v1278, 0.0
        %v1387 = vmax.f32 %v1281, 0.0
        %v1388 = vmax.f32 %v1286, 0.0
        %v1389 = vmax.f32 %v1289, 0.0
        %v1390 = vmax.f32 %v1294, 0.0
        %v1391 = vmax.f32 %v1297, 0.0
        %v1392 = vmax.f32 %v1302, 0.0
        %v1393 = vmax.f32 %v1305, 0.0
        %v1394 = vmax.f32 %v1310, 0.0
        %v1395 = vmax.f32 %v1313, 0.0
        %v1396 = vmax.f32 %v1318, 0.0
        %v1397 = vmax.f32 %v1321, 0.0
        %v1398 = vmax.f32 %v1326, 0.0
        %v1399 = vmax.f32 %v1329, 0.0
        %v1400 = vmax.f32 %v1334, 0.0
        %v1401 = vmax.f32 %v1337, 0.0
        %v1402 = vmax.f32 %v1342, 0.0
        %v1403 = vmax.f32 %v1345, 0.0
        %v1404 = vmax.f32 %v1350, 0.0
        %v1405 = vmax.f32 %v1353, 0.0
        %v1406 = vmax.f32 %v1358, 0.0
        %v1407 = vmax.f32 %v1361, 0.0
        %v1408 = vmax.f32 %v1366, 0.0
        %v1409 = vmax.f32 %v1369, 0.0
        %v1410 = vmax.f32 %v1374, 0.0
        %v1411 = vmax.f32 %v1377, 0.0
        %v1412 = vld [vmem:[%s5] sm:$0x1]
        %v1414 = vlaneseq
        %v1415 = vshrl.u32 %v1414, 7
        %v1416 = vsub.s32 0, %v1415
        %v1417 = vrot.slane %v1412, %v1416
        %v1419 = vmul.f32 %v1380, %v1417
        %v1420 = vmul.f32 %v1381, %v1417
        %v1421 = vmul.f32 %v1382, %v1417
        %v1422 = vmul.f32 %v1383, %v1417
        %v1423 = vmul.f32 %v1384, %v1417
        %v1424 = vmul.f32 %v1385, %v1417
        %v1425 = vmul.f32 %v1386, %v1417
        %v1426 = vmul.f32 %v1387, %v1417
        %v1427 = vmul.f32 %v1388, %v1417
        %v1428 = vmul.f32 %v1389, %v1417
        %v1429 = vmul.f32 %v1390, %v1417
        %v1430 = vmul.f32 %v1391, %v1417
        %v1431 = vmul.f32 %v1392, %v1417
        %v1432 = vmul.f32 %v1393, %v1417
        %v1433 = vmul.f32 %v1394, %v1417
        %v1434 = vmul.f32 %v1395, %v1417
        %v1435 = vmul.f32 %v1396, %v1417
        %v1436 = vmul.f32 %v1397, %v1417
        %v1437 = vmul.f32 %v1398, %v1417
        %v1438 = vmul.f32 %v1399, %v1417
        %v1439 = vmul.f32 %v1400, %v1417
        %v1440 = vmul.f32 %v1401, %v1417
        %v1441 = vmul.f32 %v1402, %v1417
        %v1442 = vmul.f32 %v1403, %v1417
        %v1443 = vmul.f32 %v1404, %v1417
        %v1444 = vmul.f32 %v1405, %v1417
        %v1445 = vmul.f32 %v1406, %v1417
        %v1446 = vmul.f32 %v1407, %v1417
        %v1447 = vmul.f32 %v1408, %v1417
        %v1448 = vmul.f32 %v1409, %v1417
        %v1449 = vmul.f32 %v1410, %v1417
        %v1450 = vmul.f32 %v1411, %v1417
        %1451 = vadd.xlane.f32.xlu0 %v1419
        %v1452 = vpop.xlane.xlu0 %1451
        %1453 = vadd.xlane.f32.xlu0 %v1420
        %v1454 = vpop.xlane.xlu0 %1453
        %1455 = vadd.xlane.f32.xlu0 %v1421
        %v1456 = vpop.xlane.xlu0 %1455
        %1457 = vadd.xlane.f32.xlu0 %v1422
        %v1458 = vpop.xlane.xlu0 %1457
        %1459 = vadd.xlane.f32.xlu0 %v1423
        %v1460 = vpop.xlane.xlu0 %1459
        %1461 = vadd.xlane.f32.xlu0 %v1424
        %v1462 = vpop.xlane.xlu0 %1461
        %1463 = vadd.xlane.f32.xlu0 %v1425
        %v1464 = vpop.xlane.xlu0 %1463
        %1465 = vadd.xlane.f32.xlu0 %v1426
        %v1466 = vpop.xlane.xlu0 %1465
        %1467 = vadd.xlane.f32.xlu0 %v1427
        %v1468 = vpop.xlane.xlu0 %1467
        %1469 = vadd.xlane.f32.xlu0 %v1428
        %v1470 = vpop.xlane.xlu0 %1469
        %1471 = vadd.xlane.f32.xlu0 %v1429
        %v1472 = vpop.xlane.xlu0 %1471
        %1473 = vadd.xlane.f32.xlu0 %v1430
        %v1474 = vpop.xlane.xlu0 %1473
        %1475 = vadd.xlane.f32.xlu0 %v1431
        %v1476 = vpop.xlane.xlu0 %1475
        %1477 = vadd.xlane.f32.xlu0 %v1432
        %v1478 = vpop.xlane.xlu0 %1477
        %1479 = vadd.xlane.f32.xlu0 %v1433
        %v1480 = vpop.xlane.xlu0 %1479
        %1481 = vadd.xlane.f32.xlu0 %v1434
        %v1482 = vpop.xlane.xlu0 %1481
        %1483 = vadd.xlane.f32.xlu0 %v1435
        %v1484 = vpop.xlane.xlu0 %1483
        %1485 = vadd.xlane.f32.xlu0 %v1436
        %v1486 = vpop.xlane.xlu0 %1485
        %1487 = vadd.xlane.f32.xlu0 %v1437
        %v1488 = vpop.xlane.xlu0 %1487
        %1489 = vadd.xlane.f32.xlu0 %v1438
        %v1490 = vpop.xlane.xlu0 %1489
        %1491 = vadd.xlane.f32.xlu0 %v1439
        %v1492 = vpop.xlane.xlu0 %1491
        %1493 = vadd.xlane.f32.xlu0 %v1440
        %v1494 = vpop.xlane.xlu0 %1493
        %1495 = vadd.xlane.f32.xlu0 %v1441
        %v1496 = vpop.xlane.xlu0 %1495
        %1497 = vadd.xlane.f32.xlu0 %v1442
        %v1498 = vpop.xlane.xlu0 %1497
        %1499 = vadd.xlane.f32.xlu0 %v1443
        %v1500 = vpop.xlane.xlu0 %1499
        %1501 = vadd.xlane.f32.xlu0 %v1444
        %v1502 = vpop.xlane.xlu0 %1501
        %1503 = vadd.xlane.f32.xlu0 %v1445
        %v1504 = vpop.xlane.xlu0 %1503
        %1505 = vadd.xlane.f32.xlu0 %v1446
        %v1506 = vpop.xlane.xlu0 %1505
        %1507 = vadd.xlane.f32.xlu0 %v1447
        %v1508 = vpop.xlane.xlu0 %1507
        %1509 = vadd.xlane.f32.xlu0 %v1448
        %v1510 = vpop.xlane.xlu0 %1509
        %1511 = vadd.xlane.f32.xlu0 %v1449
        %v1512 = vpop.xlane.xlu0 %1511
        %1513 = vadd.xlane.f32.xlu0 %v1450
        %v1514 = vpop.xlane.xlu0 %1513
        %v1515 = vmax.f32 %v1452, %v1484
        %v1516 = vmax.f32 %v1454, %v1486
        %v1517 = vmax.f32 %v1456, %v1488
        %v1518 = vmax.f32 %v1458, %v1490
        %v1519 = vmax.f32 %v1460, %v1492
        %v1520 = vmax.f32 %v1462, %v1494
        %v1521 = vmax.f32 %v1464, %v1496
        %v1522 = vmax.f32 %v1466, %v1498
        %v1523 = vmax.f32 %v1468, %v1500
        %v1524 = vmax.f32 %v1470, %v1502
        %v1525 = vmax.f32 %v1472, %v1504
        %v1526 = vmax.f32 %v1474, %v1506
        %v1527 = vmax.f32 %v1476, %v1508
        %v1528 = vmax.f32 %v1478, %v1510
        %v1529 = vmax.f32 %v1480, %v1512
        %v1530 = vmax.f32 %v1482, %v1514
        %v1531 = vsub.f32 %v1452, %v1515
        %v1532 = vsub.f32 %v1454, %v1516
        %v1533 = vsub.f32 %v1456, %v1517
        %v1534 = vsub.f32 %v1458, %v1518
        %v1535 = vsub.f32 %v1460, %v1519
        %v1536 = vsub.f32 %v1462, %v1520
        %v1537 = vsub.f32 %v1464, %v1521
        %v1538 = vsub.f32 %v1466, %v1522
        %v1539 = vsub.f32 %v1468, %v1523
        %v1540 = vsub.f32 %v1470, %v1524
        %v1541 = vsub.f32 %v1472, %v1525
        %v1542 = vsub.f32 %v1474, %v1526
        %v1543 = vsub.f32 %v1476, %v1527
        %v1544 = vsub.f32 %v1478, %v1528
        %v1545 = vsub.f32 %v1480, %v1529
        %v1546 = vsub.f32 %v1482, %v1530
        %v1547 = vmul.f32 %v1531, 1.442695
        %v1548 = vpow.pop %v1547
        %v1549 = vmul.f32 %v1532, 1.442695
        %v1550 = vpow.pop %v1549
        %v1551 = vmul.f32 %v1533, 1.442695
        %v1552 = vpow.pop %v1551
        %v1553 = vmul.f32 %v1534, 1.442695
        %v1554 = vpow.pop %v1553
        %v1555 = vmul.f32 %v1535, 1.442695
        %v1556 = vpow.pop %v1555
        %v1557 = vmul.f32 %v1536, 1.442695
        %v1558 = vpow.pop %v1557
        %v1559 = vmul.f32 %v1537, 1.442695
        %v1560 = vpow.pop %v1559
        %v1561 = vmul.f32 %v1538, 1.442695
        %v1562 = vpow.pop %v1561
        %v1563 = vmul.f32 %v1539, 1.442695
        %v1564 = vpow.pop %v1563
        %v1565 = vmul.f32 %v1540, 1.442695
        %v1566 = vpow.pop %v1565
        %v1567 = vmul.f32 %v1541, 1.442695
        %v1568 = vpow.pop %v1567
        %v1569 = vmul.f32 %v1542, 1.442695
        %v1570 = vpow.pop %v1569
        %v1571 = vmul.f32 %v1543, 1.442695
        %v1572 = vpow.pop %v1571
        %v1573 = vmul.f32 %v1544, 1.442695
        %v1574 = vpow.pop %v1573
        %v1575 = vmul.f32 %v1545, 1.442695
        %v1576 = vpow.pop %v1575
        %v1577 = vmul.f32 %v1546, 1.442695
        %v1578 = vpow.pop %v1577
        %v1579 = vsub.f32 %v1484, %v1515
        %v1580 = vsub.f32 %v1486, %v1516
        %v1581 = vsub.f32 %v1488, %v1517
        %v1582 = vsub.f32 %v1490, %v1518
        %v1583 = vsub.f32 %v1492, %v1519
        %v1584 = vsub.f32 %v1494, %v1520
        %v1585 = vsub.f32 %v1496, %v1521
        %v1586 = vsub.f32 %v1498, %v1522
        %v1587 = vsub.f32 %v1500, %v1523
        %v1588 = vsub.f32 %v1502, %v1524
        %v1589 = vsub.f32 %v1504, %v1525
        %v1590 = vsub.f32 %v1506, %v1526
        %v1591 = vsub.f32 %v1508, %v1527
        %v1592 = vsub.f32 %v1510, %v1528
        %v1593 = vsub.f32 %v1512, %v1529
        %v1594 = vsub.f32 %v1514, %v1530
        %v1595 = vmul.f32 %v1579, 1.442695
        %v1596 = vpow.pop %v1595
        %v1597 = vmul.f32 %v1580, 1.442695
        %v1598 = vpow.pop %v1597
        %v1599 = vmul.f32 %v1581, 1.442695
        %v1600 = vpow.pop %v1599
        %v1601 = vmul.f32 %v1582, 1.442695
        %v1602 = vpow.pop %v1601
        %v1603 = vmul.f32 %v1583, 1.442695
        %v1604 = vpow.pop %v1603
        %v1605 = vmul.f32 %v1584, 1.442695
        %v1606 = vpow.pop %v1605
        %v1607 = vmul.f32 %v1585, 1.442695
        %v1608 = vpow.pop %v1607
        %v1609 = vmul.f32 %v1586, 1.442695
        %v1610 = vpow.pop %v1609
        %v1611 = vmul.f32 %v1587, 1.442695
        %v1612 = vpow.pop %v1611
        %v1613 = vmul.f32 %v1588, 1.442695
        %v1614 = vpow.pop %v1613
        %v1615 = vmul.f32 %v1589, 1.442695
        %v1616 = vpow.pop %v1615
        %v1617 = vmul.f32 %v1590, 1.442695
        %v1618 = vpow.pop %v1617
        %v1619 = vmul.f32 %v1591, 1.442695
        %v1620 = vpow.pop %v1619
        %v1621 = vmul.f32 %v1592, 1.442695
        %v1622 = vpow.pop %v1621
        %v1623 = vmul.f32 %v1593, 1.442695
        %v1624 = vpow.pop %v1623
        %v1625 = vmul.f32 %v1594, 1.442695
        %v1626 = vpow.pop %v1625
        %v1627 = vadd.f32 %v1548, %v1596
        %v1628 = vadd.f32 %v1550, %v1598
        %v1629 = vadd.f32 %v1552, %v1600
        %v1630 = vadd.f32 %v1554, %v1602
        %v1631 = vadd.f32 %v1556, %v1604
        %v1632 = vadd.f32 %v1558, %v1606
        %v1633 = vadd.f32 %v1560, %v1608
        %v1634 = vadd.f32 %v1562, %v1610
        %v1635 = vadd.f32 %v1564, %v1612
        %v1636 = vadd.f32 %v1566, %v1614
        %v1637 = vadd.f32 %v1568, %v1616
        %v1638 = vadd.f32 %v1570, %v1618
        %v1639 = vadd.f32 %v1572, %v1620
        %v1640 = vadd.f32 %v1574, %v1622
        %v1641 = vadd.f32 %v1576, %v1624
        %v1642 = vadd.f32 %v1578, %v1626
        %v1643 = vrcp.pop %v1627
        %v1644 = vrcp.pop %v1628
        %v1645 = vrcp.pop %v1629
        %v1646 = vrcp.pop %v1630
        %v1647 = vrcp.pop %v1631
        %v1648 = vrcp.pop %v1632
        %v1649 = vrcp.pop %v1633
        %v1650 = vrcp.pop %v1634
        %v1651 = vrcp.pop %v1635
        %v1652 = vrcp.pop %v1636
        %v1653 = vrcp.pop %v1637
        %v1654 = vrcp.pop %v1638
        %v1655 = vrcp.pop %v1639
        %v1656 = vrcp.pop %v1640
        %v1657 = vrcp.pop %v1641
        %v1658 = vrcp.pop %v1642
        %v1659 = vmul.f32 %v1548, %v1643
        %v1660 = vmul.f32 %v1550, %v1644
        %v1661 = vmul.f32 %v1552, %v1645
        %v1662 = vmul.f32 %v1554, %v1646
        %v1663 = vmul.f32 %v1556, %v1647
        %v1664 = vmul.f32 %v1558, %v1648
        %v1665 = vmul.f32 %v1560, %v1649
        %v1666 = vmul.f32 %v1562, %v1650
        %v1667 = vmul.f32 %v1564, %v1651
        %v1668 = vmul.f32 %v1566, %v1652
        %v1669 = vmul.f32 %v1568, %v1653
        %v1670 = vmul.f32 %v1570, %v1654
        %v1671 = vmul.f32 %v1572, %v1655
        %v1672 = vmul.f32 %v1574, %v1656
        %v1673 = vmul.f32 %v1576, %v1657
        %v1674 = vmul.f32 %v1578, %v1658
        %v1675 = vmul.f32 %v1596, %v1643
        %v1676 = vmul.f32 %v1598, %v1644
        %v1677 = vmul.f32 %v1600, %v1645
        %v1678 = vmul.f32 %v1602, %v1646
        %v1679 = vmul.f32 %v1604, %v1647
        %v1680 = vmul.f32 %v1606, %v1648
        %v1681 = vmul.f32 %v1608, %v1649
        %v1682 = vmul.f32 %v1610, %v1650
        %v1683 = vmul.f32 %v1612, %v1651
        %v1684 = vmul.f32 %v1614, %v1652
        %v1685 = vmul.f32 %v1616, %v1653
        %v1686 = vmul.f32 %v1618, %v1654
        %v1687 = vmul.f32 %v1620, %v1655
        %v1688 = vmul.f32 %v1622, %v1656
        %v1689 = vmul.f32 %v1624, %v1657
        %v1690 = vmul.f32 %v1626, %v1658
        %v1691 = vunpack.c.l.bf16 %v507
        %v1692 = vunpack.c.h.bf16 %v507
        %v1693 = vunpack.c.l.bf16 %v508
        %v1694 = vunpack.c.l.bf16 %v509
        %v1695 = vunpack.c.h.bf16 %v509
        %v1696 = vunpack.c.l.bf16 %v510
        %v1697 = vunpack.c.l.bf16 %v511
        %v1698 = vunpack.c.h.bf16 %v511
        %v1699 = vunpack.c.l.bf16 %v512
        %v1700 = vunpack.c.l.bf16 %v513
        %v1701 = vunpack.c.h.bf16 %v513
        %v1702 = vunpack.c.l.bf16 %v514
        %v1703 = vunpack.c.l.bf16 %v515
        %v1704 = vunpack.c.h.bf16 %v515
        %v1705 = vunpack.c.l.bf16 %v516
        %v1706 = vunpack.c.l.bf16 %v517
        %v1707 = vunpack.c.h.bf16 %v517
        %v1708 = vunpack.c.l.bf16 %v518
        %v1709 = vunpack.c.l.bf16 %v519
        %v1710 = vunpack.c.h.bf16 %v519
        %v1711 = vunpack.c.l.bf16 %v520
        %v1712 = vunpack.c.l.bf16 %v521
        %v1713 = vunpack.c.h.bf16 %v521
        %v1714 = vunpack.c.l.bf16 %v522
        %v1715 = vunpack.c.l.bf16 %v523
        %v1716 = vunpack.c.h.bf16 %v523
        %v1717 = vunpack.c.l.bf16 %v524
        %v1718 = vunpack.c.l.bf16 %v525
        %v1719 = vunpack.c.h.bf16 %v525
        %v1720 = vunpack.c.l.bf16 %v526
        %v1721 = vunpack.c.l.bf16 %v527
        %v1722 = vunpack.c.h.bf16 %v527
        %v1723 = vunpack.c.l.bf16 %v528
        %v1724 = vunpack.c.l.bf16 %v529
        %v1725 = vunpack.c.h.bf16 %v529
        %v1726 = vunpack.c.l.bf16 %v530
        %v1727 = vunpack.c.l.bf16 %v531
        %v1728 = vunpack.c.h.bf16 %v531
        %v1729 = vunpack.c.l.bf16 %v532
        %v1730 = vunpack.c.l.bf16 %v533
        %v1731 = vunpack.c.h.bf16 %v533
        %v1732 = vunpack.c.l.bf16 %v534
        %v1733 = vunpack.c.l.bf16 %v535
        %v1734 = vunpack.c.h.bf16 %v535
        %v1735 = vunpack.c.l.bf16 %v536
        %v1736 = vunpack.c.l.bf16 %v537
        %v1737 = vunpack.c.h.bf16 %v537
        %v1738 = vunpack.c.l.bf16 %v538
        %v1739 = vmul.f32 %v1659, %v1691
        %v1740 = vmul.f32 %v1659, %v1692
        %v1741 = vmul.f32 %v1659, %v1693
        %v1742 = vmul.f32 %v1660, %v1694
        %v1743 = vmul.f32 %v1660, %v1695
        %v1744 = vmul.f32 %v1660, %v1696
        %v1745 = vmul.f32 %v1661, %v1697
        %v1746 = vmul.f32 %v1661, %v1698
        %v1747 = vmul.f32 %v1661, %v1699
        %v1748 = vmul.f32 %v1662, %v1700
        %v1749 = vmul.f32 %v1662, %v1701
        %v1750 = vmul.f32 %v1662, %v1702
        %v1751 = vmul.f32 %v1663, %v1703
        %v1752 = vmul.f32 %v1663, %v1704
        %v1753 = vmul.f32 %v1663, %v1705
        %v1754 = vmul.f32 %v1664, %v1706
        %v1755 = vmul.f32 %v1664, %v1707
        %v1756 = vmul.f32 %v1664, %v1708
        %v1757 = vmul.f32 %v1665, %v1709
        %v1758 = vmul.f32 %v1665, %v1710
        %v1759 = vmul.f32 %v1665, %v1711
        %v1760 = vmul.f32 %v1666, %v1712
        %v1761 = vmul.f32 %v1666, %v1713
        %v1762 = vmul.f32 %v1666, %v1714
        %v1763 = vmul.f32 %v1667, %v1715
        %v1764 = vmul.f32 %v1667, %v1716
        %v1765 = vmul.f32 %v1667, %v1717
        %v1766 = vmul.f32 %v1668, %v1718
        %v1767 = vmul.f32 %v1668, %v1719
        %v1768 = vmul.f32 %v1668, %v1720
        %v1769 = vmul.f32 %v1669, %v1721
        %v1770 = vmul.f32 %v1669, %v1722
        %v1771 = vmul.f32 %v1669, %v1723
        %v1772 = vmul.f32 %v1670, %v1724
        %v1773 = vmul.f32 %v1670, %v1725
        %v1774 = vmul.f32 %v1670, %v1726
        %v1775 = vmul.f32 %v1671, %v1727
        %v1776 = vmul.f32 %v1671, %v1728
        %v1777 = vmul.f32 %v1671, %v1729
        %v1778 = vmul.f32 %v1672, %v1730
        %v1779 = vmul.f32 %v1672, %v1731
        %v1780 = vmul.f32 %v1672, %v1732
        %v1781 = vmul.f32 %v1673, %v1733
        %v1782 = vmul.f32 %v1673, %v1734
        %v1783 = vmul.f32 %v1673, %v1735
        %v1784 = vmul.f32 %v1674, %v1736
        %v1785 = vmul.f32 %v1674, %v1737
        %v1786 = vmul.f32 %v1674, %v1738
        %v1787 = vunpack.c.l.bf16 %v539
        %v1788 = vunpack.c.h.bf16 %v539
        %v1789 = vunpack.c.l.bf16 %v540
        %v1790 = vunpack.c.l.bf16 %v541
        %v1791 = vunpack.c.h.bf16 %v541
        %v1792 = vunpack.c.l.bf16 %v542
        %v1793 = vunpack.c.l.bf16 %v543
        %v1794 = vunpack.c.h.bf16 %v543
        %v1795 = vunpack.c.l.bf16 %v544
        %v1796 = vunpack.c.l.bf16 %v545
        %v1797 = vunpack.c.h.bf16 %v545
        %v1798 = vunpack.c.l.bf16 %v546
        %v1799 = vunpack.c.l.bf16 %v547
        %v1800 = vunpack.c.h.bf16 %v547
        %v1801 = vunpack.c.l.bf16 %v548
        %v1802 = vunpack.c.l.bf16 %v549
        %v1803 = vunpack.c.h.bf16 %v549
        %v1804 = vunpack.c.l.bf16 %v550
        %v1805 = vunpack.c.l.bf16 %v551
        %v1806 = vunpack.c.h.bf16 %v551
        %v1807 = vunpack.c.l.bf16 %v552
        %v1808 = vunpack.c.l.bf16 %v553
        %v1809 = vunpack.c.h.bf16 %v553
        %v1810 = vunpack.c.l.bf16 %v554
        %v1811 = vunpack.c.l.bf16 %v555
        %v1812 = vunpack.c.h.bf16 %v555
        %v1813 = vunpack.c.l.bf16 %v556
        %v1814 = vunpack.c.l.bf16 %v557
        %v1815 = vunpack.c.h.bf16 %v557
        %v1816 = vunpack.c.l.bf16 %v558
        %v1817 = vunpack.c.l.bf16 %v559
        %v1818 = vunpack.c.h.bf16 %v559
        %v1819 = vunpack.c.l.bf16 %v560
        %v1820 = vunpack.c.l.bf16 %v561
        %v1821 = vunpack.c.h.bf16 %v561
        %v1822 = vunpack.c.l.bf16 %v562
        %v1823 = vunpack.c.l.bf16 %v563
        %v1824 = vunpack.c.h.bf16 %v563
        %v1825 = vunpack.c.l.bf16 %v564
        %v1826 = vunpack.c.l.bf16 %v565
        %v1827 = vunpack.c.h.bf16 %v565
        %v1828 = vunpack.c.l.bf16 %v566
        %v1829 = vunpack.c.l.bf16 %v567
        %v1830 = vunpack.c.h.bf16 %v567
        %v1831 = vunpack.c.l.bf16 %v568
        %v1832 = vunpack.c.l.bf16 %v569
        %v1833 = vunpack.c.h.bf16 %v569
        %v1834 = vunpack.c.l.bf16 %v570
        %v1835 = vmul.f32 %v1675, %v1787
        %v1836 = vmul.f32 %v1675, %v1788
        %v1837 = vmul.f32 %v1675, %v1789
        %v1838 = vmul.f32 %v1676, %v1790
        %v1839 = vmul.f32 %v1676, %v1791
        %v1840 = vmul.f32 %v1676, %v1792
        %v1841 = vmul.f32 %v1677, %v1793
        %v1842 = vmul.f32 %v1677, %v1794
        %v1843 = vmul.f32 %v1677, %v1795
        %v1844 = vmul.f32 %v1678, %v1796
        %v1845 = vmul.f32 %v1678, %v1797
        %v1846 = vmul.f32 %v1678, %v1798
        %v1847 = vmul.f32 %v1679, %v1799
        %v1848 = vmul.f32 %v1679, %v1800
        %v1849 = vmul.f32 %v1679, %v1801
        %v1850 = vmul.f32 %v1680, %v1802
        %v1851 = vmul.f32 %v1680, %v1803
        %v1852 = vmul.f32 %v1680, %v1804
        %v1853 = vmul.f32 %v1681, %v1805
        %v1854 = vmul.f32 %v1681, %v1806
        %v1855 = vmul.f32 %v1681, %v1807
        %v1856 = vmul.f32 %v1682, %v1808
        %v1857 = vmul.f32 %v1682, %v1809
        %v1858 = vmul.f32 %v1682, %v1810
        %v1859 = vmul.f32 %v1683, %v1811
        %v1860 = vmul.f32 %v1683, %v1812
        %v1861 = vmul.f32 %v1683, %v1813
        %v1862 = vmul.f32 %v1684, %v1814
        %v1863 = vmul.f32 %v1684, %v1815
        %v1864 = vmul.f32 %v1684, %v1816
        %v1865 = vmul.f32 %v1685, %v1817
        %v1866 = vmul.f32 %v1685, %v1818
        %v1867 = vmul.f32 %v1685, %v1819
        %v1868 = vmul.f32 %v1686, %v1820
        %v1869 = vmul.f32 %v1686, %v1821
        %v1870 = vmul.f32 %v1686, %v1822
        %v1871 = vmul.f32 %v1687, %v1823
        %v1872 = vmul.f32 %v1687, %v1824
        %v1873 = vmul.f32 %v1687, %v1825
        %v1874 = vmul.f32 %v1688, %v1826
        %v1875 = vmul.f32 %v1688, %v1827
        %v1876 = vmul.f32 %v1688, %v1828
        %v1877 = vmul.f32 %v1689, %v1829
        %v1878 = vmul.f32 %v1689, %v1830
        %v1879 = vmul.f32 %v1689, %v1831
        %v1880 = vmul.f32 %v1690, %v1832
        %v1881 = vmul.f32 %v1690, %v1833
        %v1882 = vmul.f32 %v1690, %v1834
        %v1883 = vadd.f32 %v1739, %v1835
        %v1884 = vadd.f32 %v1740, %v1836
        %v1885 = vadd.f32 %v1741, %v1837
        %v1886 = vadd.f32 %v1742, %v1838
        %v1887 = vadd.f32 %v1743, %v1839
        %v1888 = vadd.f32 %v1744, %v1840
        %v1889 = vadd.f32 %v1745, %v1841
        %v1890 = vadd.f32 %v1746, %v1842
        %v1891 = vadd.f32 %v1747, %v1843
        %v1892 = vadd.f32 %v1748, %v1844
        %v1893 = vadd.f32 %v1749, %v1845
        %v1894 = vadd.f32 %v1750, %v1846
        %v1895 = vadd.f32 %v1751, %v1847
        %v1896 = vadd.f32 %v1752, %v1848
        %v1897 = vadd.f32 %v1753, %v1849
        %v1898 = vadd.f32 %v1754, %v1850
        %v1899 = vadd.f32 %v1755, %v1851
        %v1900 = vadd.f32 %v1756, %v1852
        %v1901 = vadd.f32 %v1757, %v1853
        %v1902 = vadd.f32 %v1758, %v1854
        %v1903 = vadd.f32 %v1759, %v1855
        %v1904 = vadd.f32 %v1760, %v1856
        %v1905 = vadd.f32 %v1761, %v1857
        %v1906 = vadd.f32 %v1762, %v1858
        %v1907 = vadd.f32 %v1763, %v1859
        %v1908 = vadd.f32 %v1764, %v1860
        %v1909 = vadd.f32 %v1765, %v1861
        %v1910 = vadd.f32 %v1766, %v1862
        %v1911 = vadd.f32 %v1767, %v1863
        %v1912 = vadd.f32 %v1768, %v1864
        %v1913 = vadd.f32 %v1769, %v1865
        %v1914 = vadd.f32 %v1770, %v1866
        %v1915 = vadd.f32 %v1771, %v1867
        %v1916 = vadd.f32 %v1772, %v1868
        %v1917 = vadd.f32 %v1773, %v1869
        %v1918 = vadd.f32 %v1774, %v1870
        %v1919 = vadd.f32 %v1775, %v1871
        %v1920 = vadd.f32 %v1776, %v1872
        %v1921 = vadd.f32 %v1777, %v1873
        %v1922 = vadd.f32 %v1778, %v1874
        %v1923 = vadd.f32 %v1779, %v1875
        %v1924 = vadd.f32 %v1780, %v1876
        %v1925 = vadd.f32 %v1781, %v1877
        %v1926 = vadd.f32 %v1782, %v1878
        %v1927 = vadd.f32 %v1783, %v1879
        %v1928 = vadd.f32 %v1784, %v1880
        %v1929 = vadd.f32 %v1785, %v1881
        %v1930 = vadd.f32 %v1786, %v1882
        %v1931 = vpack.c.bf16 %v1886, %v1883
        %v1932 = vpack.c.bf16 %v1887, %v1884
        %v1933 = vpack.c.bf16 %v1888, %v1885
        %v1934 = vpack.c.bf16 %v1892, %v1889
        %v1935 = vpack.c.bf16 %v1893, %v1890
        %v1936 = vpack.c.bf16 %v1894, %v1891
        %v1937 = vpack.c.bf16 %v1898, %v1895
        %v1938 = vpack.c.bf16 %v1899, %v1896
        %v1939 = vpack.c.bf16 %v1900, %v1897
        %v1940 = vpack.c.bf16 %v1904, %v1901
        %v1941 = vpack.c.bf16 %v1905, %v1902
        %v1942 = vpack.c.bf16 %v1906, %v1903
        %v1943 = vpack.c.bf16 %v1910, %v1907
        %v1944 = vpack.c.bf16 %v1911, %v1908
        %v1945 = vpack.c.bf16 %v1912, %v1909
        %v1946 = vpack.c.bf16 %v1916, %v1913
        %v1947 = vpack.c.bf16 %v1917, %v1914
        %v1948 = vpack.c.bf16 %v1918, %v1915
        %v1949 = vpack.c.bf16 %v1922, %v1919
        %v1950 = vpack.c.bf16 %v1923, %v1920
        %v1951 = vpack.c.bf16 %v1924, %v1921
        %v1952 = vpack.c.bf16 %v1928, %v1925
        %v1953 = vpack.c.bf16 %v1929, %v1926
        %v1954 = vpack.c.bf16 %v1930, %v1927
        %v1987 = vunpack.c.l.b16 %v571
        %v1988 = vunpack.c.h.b16 %v571
        %v1989 = vunpack.c.l.b16 %v572
        %v1990 = vunpack.c.l.b16 %v573
        %v1991 = vunpack.c.h.b16 %v573
        %v1992 = vunpack.c.l.b16 %v574
        %v1993 = vunpack.c.l.b16 %v575
        %v1994 = vunpack.c.h.b16 %v575
        %v1995 = vunpack.c.l.b16 %v576
        %v1996 = vunpack.c.l.b16 %v577
        %v1997 = vunpack.c.h.b16 %v577
        %v1998 = vunpack.c.l.b16 %v578
        %v1999 = vunpack.c.l.b16 %v579
        %v2000 = vunpack.c.h.b16 %v579
        %v2001 = vunpack.c.l.b16 %v580
        %v2002 = vunpack.c.l.b16 %v581
        %v2003 = vunpack.c.h.b16 %v581
        %v2004 = vunpack.c.l.b16 %v582
        %v2005 = vunpack.c.l.b16 %v583
        %v2006 = vunpack.c.h.b16 %v583
        %v2007 = vunpack.c.l.b16 %v584
        %v2008 = vunpack.c.l.b16 %v585
        %v2009 = vunpack.c.h.b16 %v585
        %v2010 = vunpack.c.l.b16 %v586
        %v2011 = vunpack.c.l.b16 %v587
        %v2012 = vunpack.c.h.b16 %v587
        %v2013 = vunpack.c.l.b16 %v588
        %v2014 = vunpack.c.l.b16 %v589
        %v2015 = vunpack.c.h.b16 %v589
        %v2016 = vunpack.c.l.b16 %v590
        %v2017 = vunpack.c.l.b16 %v591
        %v2018 = vunpack.c.h.b16 %v591
        %v2019 = vunpack.c.l.b16 %v592
        %v2020 = vunpack.c.l.b16 %v593
        %v2021 = vunpack.c.h.b16 %v593
        %v2022 = vunpack.c.l.b16 %v594
        %v2023 = vunpack.c.l.b16 %v595
        %v2024 = vunpack.c.h.b16 %v595
        %v2025 = vunpack.c.l.b16 %v596
        %v2026 = vunpack.c.l.b16 %v597
        %v2027 = vunpack.c.h.b16 %v597
        %v2028 = vunpack.c.l.b16 %v598
        %v2029 = vunpack.c.l.b16 %v599
        %v2030 = vunpack.c.h.b16 %v599
        %v2031 = vunpack.c.l.b16 %v600
        %v2032 = vunpack.c.l.b16 %v601
        %v2033 = vunpack.c.h.b16 %v601
        %v2034 = vunpack.c.l.b16 %v602
        %v2035 = vpack.c.b16 %v1990, %v1987
        %v2036 = vpack.c.b16 %v1991, %v1988
        %v2037 = vpack.c.b16 %v1992, %v1989
        %v2038 = vpack.c.b16 %v1996, %v1993
        %v2039 = vpack.c.b16 %v1997, %v1994
        %v2040 = vpack.c.b16 %v1998, %v1995
        %v2041 = vpack.c.b16 %v2002, %v1999
        %v2042 = vpack.c.b16 %v2003, %v2000
        %v2043 = vpack.c.b16 %v2004, %v2001
        %v2044 = vpack.c.b16 %v2008, %v2005
        %v2045 = vpack.c.b16 %v2009, %v2006
        %v2046 = vpack.c.b16 %v2010, %v2007
        %v2047 = vpack.c.b16 %v2014, %v2011
        %v2048 = vpack.c.b16 %v2015, %v2012
        %v2049 = vpack.c.b16 %v2016, %v2013
        %v2050 = vpack.c.b16 %v2020, %v2017
        %v2051 = vpack.c.b16 %v2021, %v2018
        %v2052 = vpack.c.b16 %v2022, %v2019
        %v2053 = vpack.c.b16 %v2026, %v2023
        %v2054 = vpack.c.b16 %v2027, %v2024
        %v2055 = vpack.c.b16 %v2028, %v2025
        %v2056 = vpack.c.b16 %v2032, %v2029
        %v2057 = vpack.c.b16 %v2033, %v2030
        %v2058 = vpack.c.b16 %v2034, %v2031
        %v2083 = vld [vmem:[#allocation10] sm:$0xf]
        %v2084 = vld [vmem:[#allocation10 + $0x4] sm:$0xf]
        %v2085 = vld [vmem:[#allocation10 + $0x8] sm:$0xf]
        %v2086 = vld [vmem:[#allocation10 + $0xc] sm:$0xf]
        %v2087 = vld [vmem:[#allocation10 + $0x10] sm:$0xf]
        %v2088 = vld [vmem:[#allocation10 + $0x14] sm:$0xf]
        %v2089 = vld [vmem:[#allocation10 + $0x18] sm:$0xf]
        %v2090 = vld [vmem:[#allocation10 + $0x1c] sm:$0xf]
        %v2091 = vld [vmem:[#allocation10 + $0x20] sm:$0xf]
        %v2092 = vld [vmem:[#allocation10 + $0x24] sm:$0xf]
        %v2093 = vld [vmem:[#allocation10 + $0x28] sm:$0xf]
        %v2094 = vld [vmem:[#allocation10 + $0x2c] sm:$0xf]
        %v2095 = vld [vmem:[#allocation10 + $0x30] sm:$0xf]
        %v2096 = vld [vmem:[#allocation10 + $0x34] sm:$0xf]
        %v2097 = vld [vmem:[#allocation10 + $0x38] sm:$0xf]
        %v2098 = vld [vmem:[#allocation10 + $0x3c] sm:$0xf]
        %v2099 = vld [vmem:[#allocation10 + $0x40] sm:$0xf]
        %v2100 = vld [vmem:[#allocation10 + $0x44] sm:$0xf]
        %v2101 = vld [vmem:[#allocation10 + $0x48] sm:$0xf]
        %v2102 = vld [vmem:[#allocation10 + $0x4c] sm:$0xf]
        %v2103 = vld [vmem:[#allocation10 + $0x50] sm:$0xf]
        %v2104 = vld [vmem:[#allocation10 + $0x54] sm:$0xf]
        %v2105 = vld [vmem:[#allocation10 + $0x58] sm:$0xf]
        %v2106 = vld [vmem:[#allocation10 + $0x5c] sm:$0xf]
        %v2107 = vld [vmem:[#allocation10 + $0x60] sm:$0xf]
        %v2108 = vld [vmem:[#allocation10 + $0x64] sm:$0xf]
        %v2109 = vld [vmem:[#allocation10 + $0x68] sm:$0xf]
        %v2110 = vld [vmem:[#allocation10 + $0x6c] sm:$0xf]
        %v2111 = vld [vmem:[#allocation10 + $0x70] sm:$0xf]
        %v2112 = vld [vmem:[#allocation10 + $0x74] sm:$0xf]
        %v2113 = vld [vmem:[#allocation10 + $0x78] sm:$0xf]
        %v2114 = vld [vmem:[#allocation10 + $0x7c] sm:$0xf]
        %v2115 = vld [vmem:[#allocation10 + $0x80] sm:$0xf]
        %v2116 = vld [vmem:[#allocation10 + $0x84] sm:$0xf]
        %v2117 = vld [vmem:[#allocation10 + $0x88] sm:$0xf]
        %v2118 = vld [vmem:[#allocation10 + $0x8c] sm:$0xf]
        %v2119 = vld [vmem:[#allocation10 + $0x90] sm:$0xf]
        %v2120 = vld [vmem:[#allocation10 + $0x94] sm:$0xf]
        %v2121 = vld [vmem:[#allocation10 + $0x98] sm:$0xf]
        %v2122 = vld [vmem:[#allocation10 + $0x9c] sm:$0xf]
        %v2123 = vld [vmem:[#allocation10 + $0xa0] sm:$0xf]
        %v2124 = vld [vmem:[#allocation10 + $0xa4] sm:$0xf]
        %v2125 = vld [vmem:[#allocation10 + $0xa8] sm:$0xf]
        %v2126 = vld [vmem:[#allocation10 + $0xac] sm:$0xf]
        %v2127 = vld [vmem:[#allocation10 + $0xb0] sm:$0xf]
        %v2128 = vld [vmem:[#allocation10 + $0xb4] sm:$0xf]
        %v2129 = vld [vmem:[#allocation10 + $0xb8] sm:$0xf]
        %v2130 = vld [vmem:[#allocation10 + $0xbc] sm:$0xf]
        %v2131 = vld [vmem:[#allocation10 + $0xc0] sm:$0xf]
        %v2132 = vld [vmem:[#allocation10 + $0xc4] sm:$0xf]
        %v2133 = vld [vmem:[#allocation10 + $0xc8] sm:$0xf]
        %v2134 = vld [vmem:[#allocation10 + $0xcc] sm:$0xf]
        %v2135 = vld [vmem:[#allocation10 + $0xd0] sm:$0xf]
        %v2136 = vld [vmem:[#allocation10 + $0xd4] sm:$0xf]
        %v2137 = vld [vmem:[#allocation10 + $0xd8] sm:$0xf]
        %v2138 = vld [vmem:[#allocation10 + $0xdc] sm:$0xf]
        %v2139 = vld [vmem:[#allocation10 + $0xe0] sm:$0xf]
        %v2140 = vld [vmem:[#allocation10 + $0xe4] sm:$0xf]
        %v2141 = vld [vmem:[#allocation10 + $0xe8] sm:$0xf]
        %v2142 = vld [vmem:[#allocation10 + $0xec] sm:$0xf]
        %v2143 = vld [vmem:[#allocation10 + $0xf0] sm:$0xf]
        %v2144 = vld [vmem:[#allocation10 + $0xf4] sm:$0xf]
        %v2145 = vld [vmem:[#allocation10 + $0xf8] sm:$0xf]
        %v2146 = vld [vmem:[#allocation10 + $0xfc] sm:$0xf]
        %v2147 = vld [vmem:[#allocation10 + $0x100] sm:$0xf]
        %v2148 = vld [vmem:[#allocation10 + $0x104] sm:$0xf]
        %v2149 = vld [vmem:[#allocation10 + $0x108] sm:$0xf]
        %v2150 = vld [vmem:[#allocation10 + $0x10c] sm:$0xf]
        %v2151 = vld [vmem:[#allocation10 + $0x110] sm:$0xf]
        %v2152 = vld [vmem:[#allocation10 + $0x114] sm:$0xf]
        %v2153 = vld [vmem:[#allocation10 + $0x118] sm:$0xf]
        %v2154 = vld [vmem:[#allocation10 + $0x11c] sm:$0xf]
        %v2155 = vld [vmem:[#allocation10 + $0x120] sm:$0xf]
        %v2156 = vld [vmem:[#allocation10 + $0x124] sm:$0xf]
        %v2157 = vld [vmem:[#allocation10 + $0x128] sm:$0xf]
        %v2158 = vld [vmem:[#allocation10 + $0x12c] sm:$0xf]
        %v2159 = vld [vmem:[#allocation10 + $0x130] sm:$0xf]
        %v2160 = vld [vmem:[#allocation10 + $0x134] sm:$0xf]
        %v2161 = vld [vmem:[#allocation10 + $0x138] sm:$0xf]
        %v2162 = vld [vmem:[#allocation10 + $0x13c] sm:$0xf]
        %v2163 = vld [vmem:[#allocation10 + $0x140] sm:$0xf]
        %v2164 = vld [vmem:[#allocation10 + $0x144] sm:$0xf]
        %v2165 = vld [vmem:[#allocation10 + $0x148] sm:$0xf]
        %v2166 = vld [vmem:[#allocation10 + $0x14c] sm:$0xf]
        %v2167 = vld [vmem:[#allocation10 + $0x150] sm:$0xf]
        %v2168 = vld [vmem:[#allocation10 + $0x154] sm:$0xf]
        %v2169 = vld [vmem:[#allocation10 + $0x158] sm:$0xf]
        %v2170 = vld [vmem:[#allocation10 + $0x15c] sm:$0xf]
        %v2171 = vld [vmem:[#allocation10 + $0x160] sm:$0xf]
        %v2172 = vld [vmem:[#allocation10 + $0x164] sm:$0xf]
        %v2173 = vld [vmem:[#allocation10 + $0x168] sm:$0xf]
        %v2174 = vld [vmem:[#allocation10 + $0x16c] sm:$0xf]
        %v2175 = vld [vmem:[#allocation10 + $0x170] sm:$0xf]
        %v2176 = vld [vmem:[#allocation10 + $0x174] sm:$0xf]
        %v2177 = vld [vmem:[#allocation10 + $0x178] sm:$0xf]
        %v2178 = vld [vmem:[#allocation10 + $0x17c] sm:$0xf]
        %v2179 = vld [vmem:[%s7] sm:$0x1]
        %v2181 = vlaneseq
        %v2182 = vshrl.u32 %v2181, 7
        %v2183 = vsub.s32 0, %v2182
        %v2184 = vrot.slane %v2179, %v2183
        %v2282 = vunpack.c.l.b16 %v2083
        %v2283 = vunpack.c.l.b16 %v2084
        %v2284 = vunpack.c.l.b16 %v2085
        %v2285 = vunpack.c.l.b16 %v2086
        %v2286 = vunpack.c.l.b16 %v2087
        %v2287 = vunpack.c.l.b16 %v2088
        %v2288 = vunpack.c.l.b16 %v2089
        %v2289 = vunpack.c.l.b16 %v2090
        %v2290 = vunpack.c.l.b16 %v2091
        %v2291 = vunpack.c.l.b16 %v2092
        %v2292 = vunpack.c.l.b16 %v2093
        %v2293 = vunpack.c.l.b16 %v2094
        %v2294 = vunpack.c.l.b16 %v2095
        %v2295 = vunpack.c.l.b16 %v2096
        %v2296 = vunpack.c.l.b16 %v2097
        %v2297 = vunpack.c.l.b16 %v2098
        %v2298 = vunpack.c.l.b16 %v2099
        %v2299 = vunpack.c.l.b16 %v2100
        %v2300 = vunpack.c.l.b16 %v2101
        %v2301 = vunpack.c.l.b16 %v2102
        %v2302 = vunpack.c.l.b16 %v2103
        %v2303 = vunpack.c.l.b16 %v2104
        %v2304 = vunpack.c.l.b16 %v2105
        %v2305 = vunpack.c.l.b16 %v2106
        %v2306 = vunpack.c.l.b16 %v2107
        %v2307 = vunpack.c.l.b16 %v2108
        %v2308 = vunpack.c.l.b16 %v2109
        %v2309 = vunpack.c.l.b16 %v2110
        %v2310 = vunpack.c.l.b16 %v2111
        %v2311 = vunpack.c.l.b16 %v2112
        %v2312 = vunpack.c.l.b16 %v2113
        %v2313 = vunpack.c.l.b16 %v2114
        %v2314 = vunpack.c.l.b16 %v2115
        %v2315 = vunpack.c.l.b16 %v2116
        %v2316 = vunpack.c.l.b16 %v2117
        %v2317 = vunpack.c.l.b16 %v2118
        %v2318 = vunpack.c.l.b16 %v2119
        %v2319 = vunpack.c.l.b16 %v2120
        %v2320 = vunpack.c.l.b16 %v2121
        %v2321 = vunpack.c.l.b16 %v2122
        %v2322 = vunpack.c.l.b16 %v2123
        %v2323 = vunpack.c.l.b16 %v2124
        %v2324 = vunpack.c.l.b16 %v2125
        %v2325 = vunpack.c.l.b16 %v2126
        %v2326 = vunpack.c.l.b16 %v2127
        %v2327 = vunpack.c.l.b16 %v2128
        %v2328 = vunpack.c.l.b16 %v2129
        %v2329 = vunpack.c.l.b16 %v2130
        %v2330 = vunpack.c.l.b16 %v2131
        %v2331 = vunpack.c.l.b16 %v2132
        %v2332 = vunpack.c.l.b16 %v2133
        %v2333 = vunpack.c.l.b16 %v2134
        %v2334 = vunpack.c.l.b16 %v2135
        %v2335 = vunpack.c.l.b16 %v2136
        %v2336 = vunpack.c.l.b16 %v2137
        %v2337 = vunpack.c.l.b16 %v2138
        %v2338 = vunpack.c.l.b16 %v2139
        %v2339 = vunpack.c.l.b16 %v2140
        %v2340 = vunpack.c.l.b16 %v2141
        %v2341 = vunpack.c.l.b16 %v2142
        %v2342 = vunpack.c.l.b16 %v2143
        %v2343 = vunpack.c.l.b16 %v2144
        %v2344 = vunpack.c.l.b16 %v2145
        %v2345 = vunpack.c.l.b16 %v2146
        %v2346 = vunpack.c.l.b16 %v2147
        %v2347 = vunpack.c.l.b16 %v2148
        %v2348 = vunpack.c.l.b16 %v2149
        %v2349 = vunpack.c.l.b16 %v2150
        %v2350 = vunpack.c.l.b16 %v2151
        %v2351 = vunpack.c.l.b16 %v2152
        %v2352 = vunpack.c.l.b16 %v2153
        %v2353 = vunpack.c.l.b16 %v2154
        %v2354 = vunpack.c.l.b16 %v2155
        %v2355 = vunpack.c.l.b16 %v2156
        %v2356 = vunpack.c.l.b16 %v2157
        %v2357 = vunpack.c.l.b16 %v2158
        %v2358 = vunpack.c.l.b16 %v2159
        %v2359 = vunpack.c.l.b16 %v2160
        %v2360 = vunpack.c.l.b16 %v2161
        %v2361 = vunpack.c.l.b16 %v2162
        %v2362 = vunpack.c.l.b16 %v2163
        %v2363 = vunpack.c.l.b16 %v2164
        %v2364 = vunpack.c.l.b16 %v2165
        %v2365 = vunpack.c.l.b16 %v2166
        %v2366 = vunpack.c.l.b16 %v2167
        %v2367 = vunpack.c.l.b16 %v2168
        %v2368 = vunpack.c.l.b16 %v2169
        %v2369 = vunpack.c.l.b16 %v2170
        %v2370 = vunpack.c.l.b16 %v2171
        %v2371 = vunpack.c.l.b16 %v2172
        %v2372 = vunpack.c.l.b16 %v2173
        %v2373 = vunpack.c.l.b16 %v2174
        %v2374 = vunpack.c.l.b16 %v2175
        %v2375 = vunpack.c.l.b16 %v2176
        %v2376 = vunpack.c.l.b16 %v2177
        %v2377 = vunpack.c.l.b16 %v2178
        %v2378 = vpack.c.b16 %v2283, %v2282
        %v2379 = vpack.c.b16 %v2285, %v2284
        %v2380 = vpack.c.b16 %v2287, %v2286
        %v2381 = vpack.c.b16 %v2289, %v2288
        %v2382 = vpack.c.b16 %v2291, %v2290
        %v2383 = vpack.c.b16 %v2293, %v2292
        %v2384 = vpack.c.b16 %v2295, %v2294
        %v2385 = vpack.c.b16 %v2297, %v2296
        %v2386 = vpack.c.b16 %v2299, %v2298
        %v2387 = vpack.c.b16 %v2301, %v2300
        %v2388 = vpack.c.b16 %v2303, %v2302
        %v2389 = vpack.c.b16 %v2305, %v2304
        %v2390 = vpack.c.b16 %v2307, %v2306
        %v2391 = vpack.c.b16 %v2309, %v2308
        %v2392 = vpack.c.b16 %v2311, %v2310
        %v2393 = vpack.c.b16 %v2313, %v2312
        %v2394 = vpack.c.b16 %v2315, %v2314
        %v2395 = vpack.c.b16 %v2317, %v2316
        %v2396 = vpack.c.b16 %v2319, %v2318
        %v2397 = vpack.c.b16 %v2321, %v2320
        %v2398 = vpack.c.b16 %v2323, %v2322
        %v2399 = vpack.c.b16 %v2325, %v2324
        %v2400 = vpack.c.b16 %v2327, %v2326
        %v2401 = vpack.c.b16 %v2329, %v2328
        %v2402 = vpack.c.b16 %v2331, %v2330
        %v2403 = vpack.c.b16 %v2333, %v2332
        %v2404 = vpack.c.b16 %v2335, %v2334
        %v2405 = vpack.c.b16 %v2337, %v2336
        %v2406 = vpack.c.b16 %v2339, %v2338
        %v2407 = vpack.c.b16 %v2341, %v2340
        %v2408 = vpack.c.b16 %v2343, %v2342
        %v2409 = vpack.c.b16 %v2345, %v2344
        %v2410 = vpack.c.b16 %v2347, %v2346
        %v2411 = vpack.c.b16 %v2349, %v2348
        %v2412 = vpack.c.b16 %v2351, %v2350
        %v2413 = vpack.c.b16 %v2353, %v2352
        %v2414 = vpack.c.b16 %v2355, %v2354
        %v2415 = vpack.c.b16 %v2357, %v2356
        %v2416 = vpack.c.b16 %v2359, %v2358
        %v2417 = vpack.c.b16 %v2361, %v2360
        %v2418 = vpack.c.b16 %v2363, %v2362
        %v2419 = vpack.c.b16 %v2365, %v2364
        %v2420 = vpack.c.b16 %v2367, %v2366
        %v2421 = vpack.c.b16 %v2369, %v2368
        %v2422 = vpack.c.b16 %v2371, %v2370
        %v2423 = vpack.c.b16 %v2373, %v2372
        %v2424 = vpack.c.b16 %v2375, %v2374
        %v2425 = vpack.c.b16 %v2377, %v2376
        %2474 = vmatprep.subr.bf16.mxu0 0
        %2475 = vmatpush1.bf16.msra.mxu0 %v2378
        %2476 = vmatprep.subr.bf16.mxu0 0
        %2477 = vmatpush1.bf16.msra.mxu0 %v2379
        %2478 = vmatprep.subr.bf16.mxu0 0
        %2479 = vmatpush1.bf16.msra.mxu0 %v2380
        %2480 = vmatprep.subr.bf16.mxu0 0
        %2481 = vmatpush1.bf16.msra.mxu0 %v2381
        %2482 = vmatprep.subr.bf16.mxu0 0
        %2483 = vmatpush1.bf16.msra.mxu0 %v2382
        %2484 = vmatprep.subr.bf16.mxu0 0
        %2485 = vmatpush1.bf16.msra.mxu0 %v2383
        %2486 = vmatprep.subr.bf16.mxu0 0
        %2487 = vmatpush1.bf16.msra.mxu0 %v2384
        %2488 = vmatprep.subr.bf16.mxu0 0
        %2489 = vmatpush1.bf16.msra.mxu0 %v2385
        %2490 = vmatprep.subr.bf16.mxu0 0
        %2491 = vmatpush1.bf16.msra.mxu0 %v2386
        %2492 = vmatprep.subr.bf16.mxu0 0
        %2493 = vmatpush1.bf16.msra.mxu0 %v2387
        %2494 = vmatprep.subr.bf16.mxu0 0
        %2495 = vmatpush1.bf16.msra.mxu0 %v2388
        %2496 = vmatprep.subr.bf16.mxu0 0
        %2497 = vmatpush1.bf16.msra.mxu0 %v2389
        %2498 = vmatprep.subr.bf16.mxu0 0
        %2499 = vmatpush1.bf16.msra.mxu0 %v2390
        %2500 = vmatprep.subr.bf16.mxu0 0
        %2501 = vmatpush1.bf16.msra.mxu0 %v2391
        %2502 = vmatprep.subr.bf16.mxu0 0
        %2503 = vmatpush1.bf16.msra.mxu0 %v2392
        %2504 = vmatprep.subr.bf16.mxu0 0
        %2505 = vmatpush1.bf16.msra.mxu0 %v2393
        %2506 = vmatprep.mubr.bf16.mxu0 %v1932
        %2507 = vmatmul.mubr.bf16.gmra.mrb[0].mxu0 %v1931
        %v2508 = vpop.f32.mrb[0].mxu0
        %v2509 = vadd.f32 %v2184, %v2508
        %v2510 = vpop.f32.mrb[0].mxu0
        %v2511 = vpop.f32.mrb[0].mxu0
        %v2512 = vadd.f32 %v2184, %v2511
        %v2513 = vpop.f32.mrb[0].mxu0
        %2514 = vmatprep.mubr.bf16.mxu0 %v1935
        %2515 = vmatmul.mubr.bf16.gmra.mrb[0].mxu0 %v1934
        %v2516 = vpop.f32.mrb[0].mxu0
        %v2517 = vadd.f32 %v2184, %v2516
        %v2518 = vpop.f32.mrb[0].mxu0
        %v2519 = vpop.f32.mrb[0].mxu0
        %v2520 = vadd.f32 %v2184, %v2519
        %v2521 = vpop.f32.mrb[0].mxu0
        %2522 = vmatprep.mubr.bf16.mxu0 %v1938
        %2523 = vmatmul.mubr.bf16.gmra.mrb[0].mxu0 %v1937
        %v2524 = vpop.f32.mrb[0].mxu0
        %v2525 = vadd.f32 %v2184, %v2524
        %v2526 = vpop.f32.mrb[0].mxu0
        %v2527 = vpop.f32.mrb[0].mxu0
        %v2528 = vadd.f32 %v2184, %v2527
        %v2529 = vpop.f32.mrb[0].mxu0
        %2530 = vmatprep.mubr.bf16.mxu0 %v1941
        %2531 = vmatmul.mubr.bf16.gmra.mrb[0].mxu0 %v1940
        %v2532 = vpop.f32.mrb[0].mxu0
        %v2533 = vadd.f32 %v2184, %v2532
        %v2534 = vpop.f32.mrb[0].mxu0
        %v2535 = vpop.f32.mrb[0].mxu0
        %v2536 = vadd.f32 %v2184, %v2535
        %v2537 = vpop.f32.mrb[0].mxu0
        %2538 = vmatprep.mubr.bf16.mxu0 %v1944
        %2539 = vmatmul.mubr.bf16.gmra.mrb[0].mxu0 %v1943
        %v2540 = vpop.f32.mrb[0].mxu0
        %v2541 = vadd.f32 %v2184, %v2540
        %v2542 = vpop.f32.mrb[0].mxu0
        %v2543 = vpop.f32.mrb[0].mxu0
        %v2544 = vadd.f32 %v2184, %v2543
        %v2545 = vpop.f32.mrb[0].mxu0
        %2546 = vmatprep.mubr.bf16.mxu0 %v1947
        %2547 = vmatmul.mubr.bf16.gmra.mrb[0].mxu0 %v1946
        %v2548 = vpop.f32.mrb[0].mxu0
        %v2549 = vadd.f32 %v2184, %v2548
        %v2550 = vpop.f32.mrb[0].mxu0
        %v2551 = vpop.f32.mrb[0].mxu0
        %v2552 = vadd.f32 %v2184, %v2551
        %v2553 = vpop.f32.mrb[0].mxu0
        %2554 = vmatprep.mubr.bf16.mxu0 %v1950
        %2555 = vmatmul.mubr.bf16.gmra.mrb[0].mxu0 %v1949
        %v2556 = vpop.f32.mrb[0].mxu0
        %v2557 = vadd.f32 %v2184, %v2556
        %v2558 = vpop.f32.mrb[0].mxu0
        %v2559 = vpop.f32.mrb[0].mxu0
        %v2560 = vadd.f32 %v2184, %v2559
        %v2561 = vpop.f32.mrb[0].mxu0
        %2562 = vmatprep.mubr.bf16.mxu0 %v1953
        %2563 = vmatmul.mubr.bf16.gmra.mrb[0].mxu0 %v1952
        %v2564 = vpop.f32.mrb[0].mxu0
        %v2565 = vadd.f32 %v2184, %v2564
        %v2566 = vpop.f32.mrb[0].mxu0
        %v2567 = vpop.f32.mrb[0].mxu0
        %v2568 = vadd.f32 %v2184, %v2567
        %v2569 = vpop.f32.mrb[0].mxu0
        %2570 = vdwg.mxu0
        %2571 = vmatprep.subr.bf16.mxu0 0
        %2572 = vmatpush1.bf16.msra.mxu0 %v2394
        %2573 = vmatprep.subr.bf16.mxu0 0
        %2574 = vmatpush1.bf16.msra.mxu0 %v2395
        %2575 = vmatprep.subr.bf16.mxu0 0
        %2576 = vmatpush1.bf16.msra.mxu0 %v2396
        %2577 = vmatprep.subr.bf16.mxu0 0
        %2578 = vmatpush1.bf16.msra.mxu0 %v2397
        %2579 = vmatprep.subr.bf16.mxu0 0
        %2580 = vmatpush1.bf16.msra.mxu0 %v2398
        %2581 = vmatprep.subr.bf16.mxu0 0
        %2582 = vmatpush1.bf16.msra.mxu0 %v2399
        %2583 = vmatprep.subr.bf16.mxu0 0
        %2584 = vmatpush1.bf16.msra.mxu0 %v2400
        %2585 = vmatprep.subr.bf16.mxu0 0
        %2586 = vmatpush1.bf16.msra.mxu0 %v2401
        %2587 = vmatprep.subr.bf16.mxu0 0
        %2588 = vmatpush1.bf16.msra.mxu0 %v2402
        %2589 = vmatprep.subr.bf16.mxu0 0
        %2590 = vmatpush1.bf16.msra.mxu0 %v2403
        %2591 = vmatprep.subr.bf16.mxu0 0
        %2592 = vmatpush1.bf16.msra.mxu0 %v2404
        %2593 = vmatprep.subr.bf16.mxu0 0
        %2594 = vmatpush1.bf16.msra.mxu0 %v2405
        %2595 = vmatprep.subr.bf16.mxu0 0
        %2596 = vmatpush1.bf16.msra.mxu0 %v2406
        %2597 = vmatprep.subr.bf16.mxu0 0
        %2598 = vmatpush1.bf16.msra.mxu0 %v2407
        %2599 = vmatprep.subr.bf16.mxu0 0
        %2600 = vmatpush1.bf16.msra.mxu0 %v2408
        %2601 = vmatprep.subr.bf16.mxu0 0
        %2602 = vmatpush1.bf16.msra.mxu0 %v2409
        %2603 = vmatprep.mubr.bf16.mxu0 %v2035
        %2604 = vmatmul.mubr.bf16.gmra.mrb[0].mxu0 %v1933
        %v2605 = vpop.f32.mrb[0].mxu0
        %v2606 = vadd.f32 %v2509, %v2605
        %v2607 = vpop.f32.mrb[0].mxu0
        %v2608 = vpop.f32.mrb[0].mxu0
        %v2609 = vadd.f32 %v2512, %v2608
        %v2610 = vpop.f32.mrb[0].mxu0
        %2611 = vmatprep.mubr.bf16.mxu0 %v2038
        %2612 = vmatmul.mubr.bf16.gmra.mrb[0].mxu0 %v1936
        %v2613 = vpop.f32.mrb[0].mxu0
        %v2614 = vadd.f32 %v2517, %v2613
        %v2615 = vpop.f32.mrb[0].mxu0
        %v2616 = vpop.f32.mrb[0].mxu0
        %v2617 = vadd.f32 %v2520, %v2616
        %v2618 = vpop.f32.mrb[0].mxu0
        %2619 = vmatprep.mubr.bf16.mxu0 %v2041
        %2620 = vmatmul.mubr.bf16.gmra.mrb[0].mxu0 %v1939
        %v2621 = vpop.f32.mrb[0].mxu0
        %v2622 = vadd.f32 %v2525, %v2621
        %v2623 = vpop.f32.mrb[0].mxu0
        %v2624 = vpop.f32.mrb[0].mxu0
        %v2625 = vadd.f32 %v2528, %v2624
        %v2626 = vpop.f32.mrb[0].mxu0
        %2627 = vmatprep.mubr.bf16.mxu0 %v2044
        %2628 = vmatmul.mubr.bf16.gmra.mrb[0].mxu0 %v1942
        %v2629 = vpop.f32.mrb[0].mxu0
        %v2630 = vadd.f32 %v2533, %v2629
        %v2631 = vpop.f32.mrb[0].mxu0
        %v2632 = vpop.f32.mrb[0].mxu0
        %v2633 = vadd.f32 %v2536, %v2632
        %v2634 = vpop.f32.mrb[0].mxu0
        %2635 = vmatprep.mubr.bf16.mxu0 %v2047
        %2636 = vmatmul.mubr.bf16.gmra.mrb[0].mxu0 %v1945
        %v2637 = vpop.f32.mrb[0].mxu0
        %v2638 = vadd.f32 %v2541, %v2637
        %v2639 = vpop.f32.mrb[0].mxu0
        %v2640 = vpop.f32.mrb[0].mxu0
        %v2641 = vadd.f32 %v2544, %v2640
        %v2642 = vpop.f32.mrb[0].mxu0
        %2643 = vmatprep.mubr.bf16.mxu0 %v2050
        %2644 = vmatmul.mubr.bf16.gmra.mrb[0].mxu0 %v1948
        %v2645 = vpop.f32.mrb[0].mxu0
        %v2646 = vadd.f32 %v2549, %v2645
        %v2647 = vpop.f32.mrb[0].mxu0
        %v2648 = vpop.f32.mrb[0].mxu0
        %v2649 = vadd.f32 %v2552, %v2648
        %v2650 = vpop.f32.mrb[0].mxu0
        %2651 = vmatprep.mubr.bf16.mxu0 %v2053
        %2652 = vmatmul.mubr.bf16.gmra.mrb[0].mxu0 %v1951
        %v2653 = vpop.f32.mrb[0].mxu0
        %v2654 = vadd.f32 %v2557, %v2653
        %v2655 = vpop.f32.mrb[0].mxu0
        %v2656 = vpop.f32.mrb[0].mxu0
        %v2657 = vadd.f32 %v2560, %v2656
        %v2658 = vpop.f32.mrb[0].mxu0
        %2659 = vmatprep.mubr.bf16.mxu0 %v2056
        %2660 = vmatmul.mubr.bf16.gmra.mrb[0].mxu0 %v1954
        %v2661 = vpop.f32.mrb[0].mxu0
        %v2662 = vadd.f32 %v2565, %v2661
        %v2663 = vpop.f32.mrb[0].mxu0
        %v2664 = vpop.f32.mrb[0].mxu0
        %v2665 = vadd.f32 %v2568, %v2664
        %v2666 = vpop.f32.mrb[0].mxu0
        %2667 = vdwg.mxu0
        %2668 = vmatprep.subr.bf16.mxu0 0
        %2669 = vmatpush1.bf16.msra.mxu0 %v2410
        %2670 = vmatprep.subr.bf16.mxu0 0
        %2671 = vmatpush1.bf16.msra.mxu0 %v2411
        %2672 = vmatprep.subr.bf16.mxu0 0
        %2673 = vmatpush1.bf16.msra.mxu0 %v2412
        %2674 = vmatprep.subr.bf16.mxu0 0
        %2675 = vmatpush1.bf16.msra.mxu0 %v2413
        %2676 = vmatprep.subr.bf16.mxu0 0
        %2677 = vmatpush1.bf16.msra.mxu0 %v2414
        %2678 = vmatprep.subr.bf16.mxu0 0
        %2679 = vmatpush1.bf16.msra.mxu0 %v2415
        %2680 = vmatprep.subr.bf16.mxu0 0
        %2681 = vmatpush1.bf16.msra.mxu0 %v2416
        %2682 = vmatprep.subr.bf16.mxu0 0
        %2683 = vmatpush1.bf16.msra.mxu0 %v2417
        %2684 = vmatprep.subr.bf16.mxu0 0
        %2685 = vmatpush1.bf16.msra.mxu0 %v2418
        %2686 = vmatprep.subr.bf16.mxu0 0
        %2687 = vmatpush1.bf16.msra.mxu0 %v2419
        %2688 = vmatprep.subr.bf16.mxu0 0
        %2689 = vmatpush1.bf16.msra.mxu0 %v2420
        %2690 = vmatprep.subr.bf16.mxu0 0
        %2691 = vmatpush1.bf16.msra.mxu0 %v2421
        %2692 = vmatprep.subr.bf16.mxu0 0
        %2693 = vmatpush1.bf16.msra.mxu0 %v2422
        %2694 = vmatprep.subr.bf16.mxu0 0
        %2695 = vmatpush1.bf16.msra.mxu0 %v2423
        %2696 = vmatprep.subr.bf16.mxu0 0
        %2697 = vmatpush1.bf16.msra.mxu0 %v2424
        %2698 = vmatprep.subr.bf16.mxu0 0
        %2699 = vmatpush1.bf16.msra.mxu0 %v2425
        %2700 = vmatprep.mubr.bf16.mxu0 %v2037
        %2701 = vmatmul.mubr.bf16.gmra.mrb[0].mxu0 %v2036
        %v2702 = vpop.f32.mrb[0].mxu0
        %v2703 = vadd.f32 %v2606, %v2702
        %v2704 = vpop.f32.mrb[0].mxu0
        %v2705 = vpop.f32.mrb[0].mxu0
        %v2706 = vadd.f32 %v2609, %v2705
        %v2707 = vpop.f32.mrb[0].mxu0
        %2708 = vmatprep.mubr.bf16.mxu0 %v2040
        %2709 = vmatmul.mubr.bf16.gmra.mrb[0].mxu0 %v2039
        %v2710 = vpop.f32.mrb[0].mxu0
        %v2711 = vadd.f32 %v2614, %v2710
        %v2712 = vpop.f32.mrb[0].mxu0
        %v2713 = vpop.f32.mrb[0].mxu0
        %v2714 = vadd.f32 %v2617, %v2713
        %v2715 = vpop.f32.mrb[0].mxu0
        %2716 = vmatprep.mubr.bf16.mxu0 %v2043
        %2717 = vmatmul.mubr.bf16.gmra.mrb[0].mxu0 %v2042
        %v2718 = vpop.f32.mrb[0].mxu0
        %v2719 = vadd.f32 %v2622, %v2718
        %v2720 = vpop.f32.mrb[0].mxu0
        %v2721 = vpop.f32.mrb[0].mxu0
        %v2722 = vadd.f32 %v2625, %v2721
        %v2723 = vpop.f32.mrb[0].mxu0
        %2724 = vmatprep.mubr.bf16.mxu0 %v2046
        %2725 = vmatmul.mubr.bf16.gmra.mrb[0].mxu0 %v2045
        %v2726 = vpop.f32.mrb[0].mxu0
        %v2727 = vadd.f32 %v2630, %v2726
        %v2728 = vpop.f32.mrb[0].mxu0
        %v2729 = vpop.f32.mrb[0].mxu0
        %v2730 = vadd.f32 %v2633, %v2729
        %v2731 = vpop.f32.mrb[0].mxu0
        %2732 = vmatprep.mubr.bf16.mxu0 %v2049
        %2733 = vmatmul.mubr.bf16.gmra.mrb[0].mxu0 %v2048
        %v2734 = vpop.f32.mrb[0].mxu0
        %v2735 = vadd.f32 %v2638, %v2734
        %v2736 = vpop.f32.mrb[0].mxu0
        %v2737 = vpop.f32.mrb[0].mxu0
        %v2738 = vadd.f32 %v2641, %v2737
        %v2739 = vpop.f32.mrb[0].mxu0
        %2740 = vmatprep.mubr.bf16.mxu0 %v2052
        %2741 = vmatmul.mubr.bf16.gmra.mrb[0].mxu0 %v2051
        %v2742 = vpop.f32.mrb[0].mxu0
        %v2743 = vadd.f32 %v2646, %v2742
        %v2744 = vpop.f32.mrb[0].mxu0
        %v2745 = vpop.f32.mrb[0].mxu0
        %v2746 = vadd.f32 %v2649, %v2745
        %v2747 = vpop.f32.mrb[0].mxu0
        %2748 = vmatprep.mubr.bf16.mxu0 %v2055
        %2749 = vmatmul.mubr.bf16.gmra.mrb[0].mxu0 %v2054
        %v2750 = vpop.f32.mrb[0].mxu0
        %v2751 = vadd.f32 %v2654, %v2750
        %v2752 = vpop.f32.mrb[0].mxu0
        %v2753 = vpop.f32.mrb[0].mxu0
        %v2754 = vadd.f32 %v2657, %v2753
        %v2755 = vpop.f32.mrb[0].mxu0
        %2756 = vmatprep.mubr.bf16.mxu0 %v2058
        %2757 = vmatmul.mubr.bf16.gmra.mrb[0].mxu0 %v2057
        %v2758 = vpop.f32.mrb[0].mxu0
        %v2759 = vadd.f32 %v2662, %v2758
        %v2760 = vpop.f32.mrb[0].mxu0
        %v2761 = vpop.f32.mrb[0].mxu0
        %v2762 = vadd.f32 %v2665, %v2761
        %v2763 = vpop.f32.mrb[0].mxu0
        %2764 = vdwg.mxu0
        %v2765 = vmax.f32 %v2703, 0.0
        %v2766 = vmax.f32 %v2706, 0.0
        %v2767 = vmax.f32 %v2711, 0.0
        %v2768 = vmax.f32 %v2714, 0.0
        %v2769 = vmax.f32 %v2719, 0.0
        %v2770 = vmax.f32 %v2722, 0.0
        %v2771 = vmax.f32 %v2727, 0.0
        %v2772 = vmax.f32 %v2730, 0.0
        %v2773 = vmax.f32 %v2735, 0.0
        %v2774 = vmax.f32 %v2738, 0.0
        %v2775 = vmax.f32 %v2743, 0.0
        %v2776 = vmax.f32 %v2746, 0.0
        %v2777 = vmax.f32 %v2751, 0.0
        %v2778 = vmax.f32 %v2754, 0.0
        %v2779 = vmax.f32 %v2759, 0.0
        %v2780 = vmax.f32 %v2762, 0.0
        %v2781 = vld [vmem:[#allocation11] sm:$0xff]
        %v2782 = vld [vmem:[#allocation11 + $0x8] sm:$0xff]
        %v2783 = vld [vmem:[#allocation11 + $0x10] sm:$0xff]
        %v2784 = vld [vmem:[#allocation11 + $0x18] sm:$0xff]
        %v2785 = vld [vmem:[#allocation11 + $0x20] sm:$0xff]
        %v2786 = vld [vmem:[#allocation11 + $0x28] sm:$0xff]
        %v2787 = vld [vmem:[#allocation11 + $0x30] sm:$0xff]
        %v2788 = vld [vmem:[#allocation11 + $0x38] sm:$0xff]
        %v2789 = vld [vmem:[#allocation11 + $0x40] sm:$0xff]
        %v2790 = vld [vmem:[#allocation11 + $0x48] sm:$0xff]
        %v2791 = vld [vmem:[#allocation11 + $0x50] sm:$0xff]
        %v2792 = vld [vmem:[#allocation11 + $0x58] sm:$0xff]
        %v2793 = vld [vmem:[#allocation11 + $0x60] sm:$0xff]
        %v2794 = vld [vmem:[#allocation11 + $0x68] sm:$0xff]
        %v2795 = vld [vmem:[#allocation11 + $0x70] sm:$0xff]
        %v2796 = vld [vmem:[#allocation11 + $0x78] sm:$0xff]
        %v2797 = vld [vmem:[%s9] sm:$0x1]
        %v2799 = vlaneseq
        %v2800 = vshrl.u32 %v2799, 7
        %v2801 = vsub.s32 0, %v2800
        %v2802 = vrot.slane %v2797, %v2801
        %2804 = vmatprep.subr.mxu0 0.0
        %2805 = vmatpush1.msra.mxu0 %v2781
        %2806 = vmatprep.subr.mxu0 0.0
        %2807 = vmatpush1.msra.mxu0 %v2782
        %2808 = vmatprep.subr.mxu0 0.0
        %2809 = vmatpush1.msra.mxu0 %v2783
        %2810 = vmatprep.subr.mxu0 0.0
        %2811 = vmatpush1.msra.mxu0 %v2784
        %2812 = vmatprep.subr.mxu0 0.0
        %2813 = vmatpush1.msra.mxu0 %v2785
        %2814 = vmatprep.subr.mxu0 0.0
        %2815 = vmatpush1.msra.mxu0 %v2786
        %2816 = vmatprep.subr.mxu0 0.0
        %2817 = vmatpush1.msra.mxu0 %v2787
        %2818 = vmatprep.subr.mxu0 0.0
        %2819 = vmatpush1.msra.mxu0 %v2788
        %2820 = vmatprep.subr.mxu0 0.0
        %2821 = vmatpush1.msra.mxu0 %v2789
        %2822 = vmatprep.subr.mxu0 0.0
        %2823 = vmatpush1.msra.mxu0 %v2790
        %2824 = vmatprep.subr.mxu0 0.0
        %2825 = vmatpush1.msra.mxu0 %v2791
        %2826 = vmatprep.subr.mxu0 0.0
        %2827 = vmatpush1.msra.mxu0 %v2792
        %2828 = vmatprep.subr.mxu0 0.0
        %2829 = vmatpush1.msra.mxu0 %v2793
        %2830 = vmatprep.subr.mxu0 0.0
        %2831 = vmatpush1.msra.mxu0 %v2794
        %2832 = vmatprep.subr.mxu0 0.0
        %2833 = vmatpush1.msra.mxu0 %v2795
        %2834 = vmatprep.subr.mxu0 0.0
        %2835 = vmatpush1.msra.mxu0 %v2796
        %2836 = vmatprep.subr.mxu0 0.0
        %2837 = vmatpush1.msra.mxu0 0.0
        %2838 = vmatprep.subr.mxu0 0.0
        %2839 = vmatpush1.msra.mxu0 0.0
        %2840 = vmatprep.subr.mxu0 0.0
        %2841 = vmatpush1.msra.mxu0 0.0
        %2842 = vmatprep.subr.mxu0 0.0
        %2843 = vmatpush1.msra.mxu0 0.0
        %2844 = vmatprep.subr.mxu0 0.0
        %2845 = vmatpush1.msra.mxu0 0.0
        %2846 = vmatprep.subr.mxu0 0.0
        %2847 = vmatpush1.msra.mxu0 0.0
        %2848 = vmatprep.subr.mxu0 0.0
        %2849 = vmatpush1.msra.mxu0 0.0
        %2850 = vmatprep.subr.mxu0 0.0
        %2851 = vmatpush1.msra.mxu0 0.0
        %2852 = vmatprep.subr.mxu0 0.0
        %2853 = vmatpush1.msra.mxu0 0.0
        %2854 = vmatprep.subr.mxu0 0.0
        %2855 = vmatpush1.msra.mxu0 0.0
        %2856 = vmatprep.subr.mxu0 0.0
        %2857 = vmatpush1.msra.mxu0 0.0
        %2858 = vmatprep.subr.mxu0 0.0
        %2859 = vmatpush1.msra.mxu0 0.0
        %2860 = vmatprep.subr.mxu0 0.0
        %2861 = vmatpush1.msra.mxu0 0.0
        %2862 = vmatprep.subr.mxu0 0.0
        %2863 = vmatpush1.msra.mxu0 0.0
        %2864 = vmatprep.subr.mxu0 0.0
        %2865 = vmatpush1.msra.mxu0 0.0
        %2866 = vmatprep.subr.mxu0 0.0
        %2867 = vmatpush1.msra.mxu0 0.0
        %2868 = vmatprep.mubr.f32.mxu0 0.0
        %2869 = vmatmul.mubr.f32.gmra.mrb[0].mxu0 %v2765
        %v2870 = vpop.f32.mrb[0].mxu0
        %v2871 = vadd.f32 %v2802, %v2870
        %v2872 = vpop.f32.mrb[0].mxu0
        %2873 = vmatprep.mubr.f32.mxu0 0.0
        %2874 = vmatmul.mubr.f32.gmra.mrb[0].mxu0 %v2766
        %v2875 = vpop.f32.mrb[0].mxu0
        %v2876 = vadd.f32 %v2802, %v2875
        %v2877 = vpop.f32.mrb[0].mxu0
        %2878 = vmatprep.mubr.f32.mxu0 0.0
        %2879 = vmatmul.mubr.f32.gmra.mrb[0].mxu0 %v2767
        %v2880 = vpop.f32.mrb[0].mxu0
        %v2881 = vadd.f32 %v2802, %v2880
        %v2882 = vpop.f32.mrb[0].mxu0
        %2883 = vmatprep.mubr.f32.mxu0 0.0
        %2884 = vmatmul.mubr.f32.gmra.mrb[0].mxu0 %v2768
        %v2885 = vpop.f32.mrb[0].mxu0
        %v2886 = vadd.f32 %v2802, %v2885
        %v2887 = vpop.f32.mrb[0].mxu0
        %2888 = vmatprep.mubr.f32.mxu0 0.0
        %2889 = vmatmul.mubr.f32.gmra.mrb[0].mxu0 %v2769
        %v2890 = vpop.f32.mrb[0].mxu0
        %v2891 = vadd.f32 %v2802, %v2890
        %v2892 = vpop.f32.mrb[0].mxu0
        %2893 = vmatprep.mubr.f32.mxu0 0.0
        %2894 = vmatmul.mubr.f32.gmra.mrb[0].mxu0 %v2770
        %v2895 = vpop.f32.mrb[0].mxu0
        %v2896 = vadd.f32 %v2802, %v2895
        %v2897 = vpop.f32.mrb[0].mxu0
        %2898 = vmatprep.mubr.f32.mxu0 0.0
        %2899 = vmatmul.mubr.f32.gmra.mrb[0].mxu0 %v2771
        %v2900 = vpop.f32.mrb[0].mxu0
        %v2901 = vadd.f32 %v2802, %v2900
        %v2902 = vpop.f32.mrb[0].mxu0
        %2903 = vmatprep.mubr.f32.mxu0 0.0
        %2904 = vmatmul.mubr.f32.gmra.mrb[0].mxu0 %v2772
        %v2905 = vpop.f32.mrb[0].mxu0
        %v2906 = vadd.f32 %v2802, %v2905
        %v2907 = vpop.f32.mrb[0].mxu0
        %2908 = vmatprep.mubr.f32.mxu0 0.0
        %2909 = vmatmul.mubr.f32.gmra.mrb[0].mxu0 %v2773
        %v2910 = vpop.f32.mrb[0].mxu0
        %v2911 = vadd.f32 %v2802, %v2910
        %v2912 = vpop.f32.mrb[0].mxu0
        %2913 = vmatprep.mubr.f32.mxu0 0.0
        %2914 = vmatmul.mubr.f32.gmra.mrb[0].mxu0 %v2774
        %v2915 = vpop.f32.mrb[0].mxu0
        %v2916 = vadd.f32 %v2802, %v2915
        %v2917 = vpop.f32.mrb[0].mxu0
        %2918 = vmatprep.mubr.f32.mxu0 0.0
        %2919 = vmatmul.mubr.f32.gmra.mrb[0].mxu0 %v2775
        %v2920 = vpop.f32.mrb[0].mxu0
        %v2921 = vadd.f32 %v2802, %v2920
        %v2922 = vpop.f32.mrb[0].mxu0
        %2923 = vmatprep.mubr.f32.mxu0 0.0
        %2924 = vmatmul.mubr.f32.gmra.mrb[0].mxu0 %v2776
        %v2925 = vpop.f32.mrb[0].mxu0
        %v2926 = vadd.f32 %v2802, %v2925
        %v2927 = vpop.f32.mrb[0].mxu0
        %2928 = vmatprep.mubr.f32.mxu0 0.0
        %2929 = vmatmul.mubr.f32.gmra.mrb[0].mxu0 %v2777
        %v2930 = vpop.f32.mrb[0].mxu0
        %v2931 = vadd.f32 %v2802, %v2930
        %v2932 = vpop.f32.mrb[0].mxu0
        %2933 = vmatprep.mubr.f32.mxu0 0.0
        %2934 = vmatmul.mubr.f32.gmra.mrb[0].mxu0 %v2778
        %v2935 = vpop.f32.mrb[0].mxu0
        %v2936 = vadd.f32 %v2802, %v2935
        %v2937 = vpop.f32.mrb[0].mxu0
        %2938 = vmatprep.mubr.f32.mxu0 0.0
        %2939 = vmatmul.mubr.f32.gmra.mrb[0].mxu0 %v2779
        %v2940 = vpop.f32.mrb[0].mxu0
        %v2941 = vadd.f32 %v2802, %v2940
        %v2942 = vpop.f32.mrb[0].mxu0
        %2943 = vmatprep.mubr.f32.mxu0 0.0
        %2944 = vmatmul.mubr.f32.gmra.mrb[0].mxu0 %v2780
        %v2945 = vpop.f32.mrb[0].mxu0
        %v2946 = vadd.f32 %v2802, %v2945
        %v2947 = vpop.f32.mrb[0].mxu0
        %2948 = vdwg.mxu0
        %2949 = vst [vmem:[%s501] sm:$0xff] %v2871
        %2950 = vst [vmem:[%s501 + $0x8] sm:$0xff] %v2876
        %2951 = vst [vmem:[%s501 + $0x10] sm:$0xff] %v2881
        %2952 = vst [vmem:[%s501 + $0x18] sm:$0xff] %v2886
        %2953 = vst [vmem:[%s501 + $0x20] sm:$0xff] %v2891
        %2954 = vst [vmem:[%s501 + $0x28] sm:$0xff] %v2896
        %2955 = vst [vmem:[%s501 + $0x30] sm:$0xff] %v2901
        %2956 = vst [vmem:[%s501 + $0x38] sm:$0xff] %v2906
        %2957 = vst [vmem:[%s501 + $0x40] sm:$0xff] %v2911
        %2958 = vst [vmem:[%s501 + $0x48] sm:$0xff] %v2916
        %2959 = vst [vmem:[%s501 + $0x50] sm:$0xff] %v2921
        %2960 = vst [vmem:[%s501 + $0x58] sm:$0xff] %v2926
        %2961 = vst [vmem:[%s501 + $0x60] sm:$0xff] %v2931
        %2962 = vst [vmem:[%s501 + $0x68] sm:$0xff] %v2936
        %2963 = vst [vmem:[%s501 + $0x70] sm:$0xff] %v2941
        %2964 = vst [vmem:[%s501 + $0x78] sm:$0xff] %v2946
        %s2965 = sand.u32 %s265, 1
        %s2966 = scalar_lea.sflag [#allocation4], %s2965
        %s2967 = sand.u32 %s265, 1
        %s2968 = smul.addr %s2967, 128
        %s2969 = scalar_lea.vmem [#allocation13], %s2968
        // Predicated region
        $region85: #{tpu_custom_call.1} parent=59 // pred_check
          %p2970 = pneg %p275
        $region86: #{tpu_custom_call.1} parent=59 // pred_check_branch
          %2972 = sbr.rel (%p2970) target = $region88
        $region87: #{tpu_custom_call.1} parent=59 // pred_region
          %s2973 = smul.u32 16, %s32
          %s2975 = ssub.s32 2048, 2048
          %2976 = vsyncadd %s2966, %s2975
          %s2977 = smul.addr %s2973, 128
          %s2978 = scalar_lea.hbm %s10, %s2977
          %s2979 = sshll.u32 %s2969, 4
          %s2980 = int_to_ptr.vmem [resolvable:$true] %s2979
          %2985 = dma.vmem_to_hbm [thread:$0]  %s2980, 2048, %s2978, %s2966, 128, 128, 8
        $region88: #{tpu_custom_call.1} parent=59 // pred_fallthru
          _
      $region60: #{tpu_custom_call.1} parent=5 // pred_fallthru
        _
      %p2986 = scmp.le.s32.totalorder 2, %s27
      // Predicated region
      $region89: #{tpu_custom_call.1} parent=5 // pred_check
        %p2987 = pneg %p2986
      $region90: #{tpu_custom_call.1} parent=5 // pred_check_branch
        %2989 = sbr.rel (%p2987) target = $region92
      $region91: #{tpu_custom_call.1} parent=5 // pred_region
        %s2990 = ssub.s32 %s27, 2
        // Predicated region
        $region93: #{tpu_custom_call.1} parent=91 // pred_check
          %p2991 = pneg %p281
        $region94: #{tpu_custom_call.1} parent=91 // pred_check_branch
          %2993 = sbr.rel (%p2991) target = $region96
        $region95: #{tpu_custom_call.1} parent=91 // pred_region
          %s2994 = sand.u32 %s266, 1
          %s2995 = scalar_lea.sflag [#allocation4], %s2994
          %s2996 = sand.u32 %s266, 1
          %s2997 = smul.addr %s2996, 128
          %s2998 = scalar_lea.vmem [#allocation13], %s2997
          %2999 = dma.done %s2995, 2048
        $region96: #{tpu_custom_call.1} parent=91 // pred_fallthru
          _
      $region92: #{tpu_custom_call.1} parent=5 // pred_fallthru
        _
    $region6: #{tpu_custom_call.1} parent=1 // loop_footer
      %s31 = sadd.s32 1, %s27
    $region7: #{tpu_custom_call.1} parent=1 // loop_footer_branch
      %26 = sbr.rel target = $region3
    $region8: #{tpu_custom_call.1} parent=1 // loop_exit
      _
    %3000 = vsyncpa [#allocation3], 1
    %s3001 = scalar_lea.sflag [#allocation3], 1
    %3002 = vsyncpa %s3001, 1
    %3003 = vsyncpa [#allocation6], 1
    %s3004 = scalar_lea.sflag [#allocation6], 1
    %3005 = vsyncpa %s3004, 1
    %3006 = vsyncpa [#allocation9], 1
    %3007 = vsyncpa [#allocation12], 1
    %3008 = vsyncpa [#allocation4], 1
    %s3009 = scalar_lea.sflag [#allocation4], 1
    %3010 = vsyncpa %s3009, 1

</llo_original>
